<compile_context>
chip_gen: v5e
topology: v5e:2x2
jax: 0.10.0
libtpu: 0.0.40
codegen_flags: <defaults>
</compile_context>

<pallas_src>
import math

import jax
import jax.numpy as jnp
from jax.experimental import pallas as pl
from jax.experimental.pallas import tpu as pltpu


def _num_batch_blocks(batch):
    """1 grid step on single-TC chips (v5e/v6e), 2 on dual-TC chips (v7x/v4/v5p)."""
    try:
        kind = jax.devices()[0].device_kind.lower()
    except Exception:
        kind = ""
    dual_tc = (
        ("v7" in kind)
        or ("v4" in kind)
        or ("v5p" in kind)
        or ("v5" in kind and "lite" not in kind and "v5e" not in kind)
    )
    if dual_tc and batch % 2 == 0:
        return 2
    return 1


def _upsample_conv_impl(x, weight, bias):
    """x: (B, Cin, H, W) NCHW; weight: (k, k, Cin, Cout) HWIO; bias: (Cout,)."""
    B, C, H, W = x.shape
    k, k2, Cin, Cout = weight.shape
    assert k == k2 and Cin == C
    assert k % 2 == 1, "only odd kernel_size matches PyTorch's symmetric padding"
    p = (k - 1) // 2

    # ---- parity folding geometry -------------------------------------------
    # For output parity dy, original-weight row kh reads source-row offset
    # floor((dy + kh - p)/2); the union of offsets over parities/taps spans
    # kf = pad_lo + pad_hi + 1 values (kf = 3 for k = 3).
    pad_lo = (p + 1) // 2
    pad_hi = (k - p) // 2
    kf = pad_lo + pad_hi + 1

    Cin_pad = max(8, -(-Cin // 8) * 8)          # sublane-aligned matmul operands
    M = 4 * Cout                                # (co, dy, dx) stacked along M

    # Lane-dense output: L_out = H * Wp must be a multiple of 128.
    lane = 128
    mult = lane // math.gcd(H, lane)
    Wp = W + pad_lo + pad_hi
    Wp = -(-Wp // mult) * mult
    Hp = H + (kf - 1) + (1 if kf > 1 else 0)    # room for the flat-shift slices
    L_in = Hp * Wp
    L_out = H * Wp

    n_blocks = _num_batch_blocks(B)
    Bloc = B // n_blocks

    # ---- wrapper-side prep (all tiny) ---------------------------------------
    xp = jnp.pad(x, ((0, 0), (0, Cin_pad - Cin),
                     (pad_lo, Hp - H - pad_lo), (pad_lo, Wp - W - pad_lo)))
    xp = xp.reshape(B, Cin_pad, L_in).astype(jnp.bfloat16)

    # Folded weights: w_fold[dy, dx, a, b, ci, co] = sum of weight[kh, kw, ci, co]
    # over original taps (kh, kw) landing on folded tap (a, b) for that parity.
    w_fold = jnp.zeros((2, 2, kf, kf, Cin_pad, Cout), jnp.float32)
    for dy in range(2):
        for dx in range(2):
            for kh in range(k):
                for kw in range(k):
                    a = pad_lo + (dy + kh - p) // 2
                    b = pad_lo + (dx + kw - p) // 2
                    w_fold = w_fold.at[dy, dx, a, b, :Cin, :].add(weight[kh, kw])
    # w_taps[t = a*kf + b, m = co*4 + dy*2 + dx, ci]
    w_taps = jnp.transpose(w_fold, (2, 3, 5, 0, 1, 4)).reshape(kf * kf, M, Cin_pad)
    w_taps = w_taps.astype(jnp.bfloat16)

    b_col = jnp.repeat(bias.astype(jnp.float32), 4).reshape(M, 1)

    # ---- kernel --------------------------------------------------------------
    def kernel(x_ref, w_ref, b_ref, o_ref):
        # x_ref: (Bloc, Cin_pad, L_in) bf16   padded, flattened original-res act
        # w_ref: (kf*kf, M, Cin_pad)   bf16   parity-folded tap weights
        # b_ref: (M, 1)                f32
        # o_ref: (Bloc, M, L_out)      f32    per-parity, channel-major flat output
        bias_v = b_ref[...]
        for bb in range(Bloc):
            acc = None
            for a in range(kf):
                for b in range(kf):
                    # 2-D tap shift == static 1-D lane shift on the flat layout.
                    xs = x_ref[bb, :, pl.ds(a * Wp + b, L_out)]   # (Cin_pad, L_out)
                    part = jnp.dot(w_ref[a * kf + b], xs,
                                   preferred_element_type=jnp.float32)
                    acc = part if acc is None else acc + part
            o_ref[bb, :, :] = (acc + bias_v).astype(o_ref.dtype)

    flops = 2 * B * M * Cin_pad * kf * kf * L_out
    bytes_accessed = (B * Cin_pad * L_in * 2          # bf16 activation in
                      + kf * kf * M * Cin_pad * 2     # bf16 folded weights
                      + M * 4                         # f32 bias
                      + B * M * L_out * 4)            # f32 output

    out_flat = pl.pallas_call(
        kernel,
        out_shape=jax.ShapeDtypeStruct((B, M, L_out), x.dtype),
        grid=(n_blocks,),
        in_specs=[
            pl.BlockSpec((Bloc, Cin_pad, L_in), lambda g: (g, 0, 0)),
            pl.BlockSpec((kf * kf, M, Cin_pad), lambda g: (0, 0, 0)),
            pl.BlockSpec((M, 1), lambda g: (0, 0)),
        ],
        out_specs=pl.BlockSpec((Bloc, M, L_out), lambda g: (g, 0, 0)),
        compiler_params=pltpu.CompilerParams(
            dimension_semantics=("parallel",),
            vmem_limit_bytes=64 * 1024 * 1024),
        cost_estimate=pl.CostEstimate(
            flops=flops, transcendentals=0, bytes_accessed=bytes_accessed),
    )(xp, w_taps, b_col)

    # Parity interleave back to NCHW (single fused slice+transpose pass in XLA).
    out = out_flat.reshape(B, Cout, 2, 2, H, Wp)[:, :, :, :, :, :W]
    out = jnp.transpose(out, (0, 1, 4, 2, 5, 3))      # (B, Cout, H, dy, W, dx)
    return out.reshape(B, Cout, 2 * H, 2 * W)


upsample_conv = jax.jit(_upsample_conv_impl)


def _reference(x, weight, bias):
    """Plain-JAX replica of the exact PyTorch forward (cat -> D2S -> conv), f32."""
    B, C, H, W = x.shape
    k = weight.shape[0]
    p = (k - 1) // 2
    x_cat = jnp.concatenate([x, x, x, x], axis=1)
    d2s = x_cat.reshape(B, 2, 2, C, H, W)
    d2s = jnp.transpose(d2s, (0, 3, 4, 1, 5, 2)).reshape(B, C, 2 * H, 2 * W)
    out = jax.lax.conv_general_dilated(
        d2s, weight, window_strides=(1, 1), padding=((p, p), (p, p)),
        dimension_numbers=("NCHW", "HWIO", "NCHW"))
    return out + bias[None, :, None, None]


if __name__ == "__main__":
    B, C, H, W = 2, 4, 16, 16        # input_dim = 4
    Cout, k = 4, 3                   # output_dim = 4, kernel_size = 3

    key = jax.random.PRNGKey(0)
    kw_key, kb_key, kx_key = jax.random.split(key, 3)

    # Deterministic synthetic params (Conv2d-style uniform bounds), HWIO weights.
    fan_in = C * k * k
    bound = 1.0 / (fan_in ** 0.5)
    weight = jax.random.uniform(kw_key, (k, k, C, Cout), jnp.float32, -bound, bound)
    bias = jax.random.uniform(kb_key, (Cout,), jnp.float32, -bound, bound)
    x = jax.random.normal(kx_key, (B, C, H, W), jnp.float32)

    out = jax.block_until_ready(upsample_conv(x, weight, bias))

    ref = _reference(x, weight, bias)
    assert out.shape == (B, Cout, 2 * H, 2 * W), out.shape
    # bf16 operands on the MXU (f32 accumulation) -> tolerance loosened per review.
    assert jnp.allclose(out, ref, atol=2e-2, rtol=2e-2), float(
        jnp.max(jnp.abs(out - ref)))

    print("KERNEL_OK")
</pallas_src>

<mosaic_0001>
module attributes {stable_mosaic.version = 11 : i64} {
  func.func @kernel(%arg0: i32, %arg1: memref<2x8x456xbf16, #tpu.memory_space<vmem>>, %arg2: memref<9x16x8xbf16, #tpu.memory_space<vmem>>, %arg3: memref<16x1xf32, #tpu.memory_space<vmem>>, %arg4: memref<2x16x384xf32, #tpu.memory_space<vmem>>) attributes {dimension_semantics = [#tpu.dimension_semantics<parallel>], iteration_bounds = array<i64: 1>, scalar_prefetch = 0 : i64, scratch_operands = 0 : i64, tpu.core_type = #tpu.core_type<tc>, window_params = [{transform_indices = @transform_0, window_bounds = array<i64: 2, 8, 456>}, {pipeline_mode = #tpu.pipeline_mode<synchronous>, transform_indices = @transform_1, window_bounds = array<i64: 9, 16, 8>}, {pipeline_mode = #tpu.pipeline_mode<synchronous>, transform_indices = @transform_2, window_bounds = array<i64: 16, 1>}, {transform_indices = @transform_3, window_bounds = array<i64: 2, 16, 384>}]} {
    %c0 = arith.constant 0 : index
    %c0_0 = arith.constant 0 : index
    %0 = vector.load %arg3[%c0, %c0_0] : memref<16x1xf32, #tpu.memory_space<vmem>>, vector<16x1xf32>
    %c0_1 = arith.constant 0 : index
    %c0_2 = arith.constant 0 : index
    %c0_3 = arith.constant 0 : index
    %1 = vector.load %arg1[%c0_1, %c0_2, %c0_3] : memref<2x8x456xbf16, #tpu.memory_space<vmem>>, vector<1x8x384xbf16>
    %2 = vector.shape_cast %1 : vector<1x8x384xbf16> to vector<8x384xbf16>
    %c0_4 = arith.constant 0 : index
    %c0_5 = arith.constant 0 : index
    %c0_6 = arith.constant 0 : index
    %3 = vector.load %arg2[%c0_4, %c0_5, %c0_6] : memref<9x16x8xbf16, #tpu.memory_space<vmem>>, vector<1x16x8xbf16>
    %4 = vector.shape_cast %3 : vector<1x16x8xbf16> to vector<16x8xbf16>
    %cst = arith.constant dense<0.000000e+00> : vector<16x384xf32>
    %5 = tpu.matmul %4, %2, %cst {dimension_numbers = #tpu.dot_dimension_numbers<[1], [0], [0], [1], [0, 0, 1, 1], [], []>} : vector<16x8xbf16>, vector<8x384xbf16>, vector<16x384xf32> -> vector<16x384xf32>
    %c0_7 = arith.constant 0 : index
    %c0_8 = arith.constant 0 : index
    %c1 = arith.constant 1 : index
    %6 = vector.load %arg1[%c0_7, %c0_8, %c1] : memref<2x8x456xbf16, #tpu.memory_space<vmem>>, vector<1x8x384xbf16>
    %7 = vector.shape_cast %6 : vector<1x8x384xbf16> to vector<8x384xbf16>
    %c1_9 = arith.constant 1 : index
    %c0_10 = arith.constant 0 : index
    %c0_11 = arith.constant 0 : index
    %8 = vector.load %arg2[%c1_9, %c0_10, %c0_11] : memref<9x16x8xbf16, #tpu.memory_space<vmem>>, vector<1x16x8xbf16>
    %9 = vector.shape_cast %8 : vector<1x16x8xbf16> to vector<16x8xbf16>
    %cst_12 = arith.constant dense<0.000000e+00> : vector<16x384xf32>
    %10 = tpu.matmul %9, %7, %cst_12 {dimension_numbers = #tpu.dot_dimension_numbers<[1], [0], [0], [1], [0, 0, 1, 1], [], []>} : vector<16x8xbf16>, vector<8x384xbf16>, vector<16x384xf32> -> vector<16x384xf32>
    %11 = arith.addf %5, %10 : vector<16x384xf32>
    %c0_13 = arith.constant 0 : index
    %c0_14 = arith.constant 0 : index
    %c2 = arith.constant 2 : index
    %12 = vector.load %arg1[%c0_13, %c0_14, %c2] : memref<2x8x456xbf16, #tpu.memory_space<vmem>>, vector<1x8x384xbf16>
    %13 = vector.shape_cast %12 : vector<1x8x384xbf16> to vector<8x384xbf16>
    %c2_15 = arith.constant 2 : index
    %c0_16 = arith.constant 0 : index
    %c0_17 = arith.constant 0 : index
    %14 = vector.load %arg2[%c2_15, %c0_16, %c0_17] : memref<9x16x8xbf16, #tpu.memory_space<vmem>>, vector<1x16x8xbf16>
    %15 = vector.shape_cast %14 : vector<1x16x8xbf16> to vector<16x8xbf16>
    %cst_18 = arith.constant dense<0.000000e+00> : vector<16x384xf32>
    %16 = tpu.matmul %15, %13, %cst_18 {dimension_numbers = #tpu.dot_dimension_numbers<[1], [0], [0], [1], [0, 0, 1, 1], [], []>} : vector<16x8xbf16>, vector<8x384xbf16>, vector<16x384xf32> -> vector<16x384xf32>
    %17 = arith.addf %11, %16 : vector<16x384xf32>
    %c0_19 = arith.constant 0 : index
    %c0_20 = arith.constant 0 : index
    %c24 = arith.constant 24 : index
    %18 = vector.load %arg1[%c0_19, %c0_20, %c24] : memref<2x8x456xbf16, #tpu.memory_space<vmem>>, vector<1x8x384xbf16>
    %19 = vector.shape_cast %18 : vector<1x8x384xbf16> to vector<8x384xbf16>
    %c3 = arith.constant 3 : index
    %c0_21 = arith.constant 0 : index
    %c0_22 = arith.constant 0 : index
    %20 = vector.load %arg2[%c3, %c0_21, %c0_22] : memref<9x16x8xbf16, #tpu.memory_space<vmem>>, vector<1x16x8xbf16>
    %21 = vector.shape_cast %20 : vector<1x16x8xbf16> to vector<16x8xbf16>
    %cst_23 = arith.constant dense<0.000000e+00> : vector<16x384xf32>
    %22 = tpu.matmul %21, %19, %cst_23 {dimension_numbers = #tpu.dot_dimension_numbers<[1], [0], [0], [1], [0, 0, 1, 1], [], []>} : vector<16x8xbf16>, vector<8x384xbf16>, vector<16x384xf32> -> vector<16x384xf32>
    %23 = arith.addf %17, %22 : vector<16x384xf32>
    %c0_24 = arith.constant 0 : index
    %c0_25 = arith.constant 0 : index
    %c25 = arith.constant 25 : index
    %24 = vector.load %arg1[%c0_24, %c0_25, %c25] : memref<2x8x456xbf16, #tpu.memory_space<vmem>>, vector<1x8x384xbf16>
    %25 = vector.shape_cast %24 : vector<1x8x384xbf16> to vector<8x384xbf16>
    %c4 = arith.constant 4 : index
    %c0_26 = arith.constant 0 : index
    %c0_27 = arith.constant 0 : index
    %26 = vector.load %arg2[%c4, %c0_26, %c0_27] : memref<9x16x8xbf16, #tpu.memory_space<vmem>>, vector<1x16x8xbf16>
    %27 = vector.shape_cast %26 : vector<1x16x8xbf16> to vector<16x8xbf16>
    %cst_28 = arith.constant dense<0.000000e+00> : vector<16x384xf32>
    %28 = tpu.matmul %27, %25, %cst_28 {dimension_numbers = #tpu.dot_dimension_numbers<[1], [0], [0], [1], [0, 0, 1, 1], [], []>} : vector<16x8xbf16>, vector<8x384xbf16>, vector<16x384xf32> -> vector<16x384xf32>
    %29 = arith.addf %23, %28 : vector<16x384xf32>
    %c0_29 = arith.constant 0 : index
    %c0_30 = arith.constant 0 : index
    %c26 = arith.constant 26 : index
    %30 = vector.load %arg1[%c0_29, %c0_30, %c26] : memref<2x8x456xbf16, #tpu.memory_space<vmem>>, vector<1x8x384xbf16>
    %31 = vector.shape_cast %30 : vector<1x8x384xbf16> to vector<8x384xbf16>
    %c5 = arith.constant 5 : index
    %c0_31 = arith.constant 0 : index
    %c0_32 = arith.constant 0 : index
    %32 = vector.load %arg2[%c5, %c0_31, %c0_32] : memref<9x16x8xbf16, #tpu.memory_space<vmem>>, vector<1x16x8xbf16>
    %33 = vector.shape_cast %32 : vector<1x16x8xbf16> to vector<16x8xbf16>
    %cst_33 = arith.constant dense<0.000000e+00> : vector<16x384xf32>
    %34 = tpu.matmul %33, %31, %cst_33 {dimension_numbers = #tpu.dot_dimension_numbers<[1], [0], [0], [1], [0, 0, 1, 1], [], []>} : vector<16x8xbf16>, vector<8x384xbf16>, vector<16x384xf32> -> vector<16x384xf32>
    %35 = arith.addf %29, %34 : vector<16x384xf32>
    %c0_34 = arith.constant 0 : index
    %c0_35 = arith.constant 0 : index
    %c48 = arith.constant 48 : index
    %36 = vector.load %arg1[%c0_34, %c0_35, %c48] : memref<2x8x456xbf16, #tpu.memory_space<vmem>>, vector<1x8x384xbf16>
    %37 = vector.shape_cast %36 : vector<1x8x384xbf16> to vector<8x384xbf16>
    %c6 = arith.constant 6 : index
    %c0_36 = arith.constant 0 : index
    %c0_37 = arith.constant 0 : index
    %38 = vector.load %arg2[%c6, %c0_36, %c0_37] : memref<9x16x8xbf16, #tpu.memory_space<vmem>>, vector<1x16x8xbf16>
    %39 = vector.shape_cast %38 : vector<1x16x8xbf16> to vector<16x8xbf16>
    %cst_38 = arith.constant dense<0.000000e+00> : vector<16x384xf32>
    %40 = tpu.matmul %39, %37, %cst_38 {dimension_numbers = #tpu.dot_dimension_numbers<[1], [0], [0], [1], [0, 0, 1, 1], [], []>} : vector<16x8xbf16>, vector<8x384xbf16>, vector<16x384xf32> -> vector<16x384xf32>
    %41 = arith.addf %35, %40 : vector<16x384xf32>
    %c0_39 = arith.constant 0 : index
    %c0_40 = arith.constant 0 : index
    %c49 = arith.constant 49 : index
    %42 = vector.load %arg1[%c0_39, %c0_40, %c49] : memref<2x8x456xbf16, #tpu.memory_space<vmem>>, vector<1x8x384xbf16>
    %43 = vector.shape_cast %42 : vector<1x8x384xbf16> to vector<8x384xbf16>
    %c7 = arith.constant 7 : index
    %c0_41 = arith.constant 0 : index
    %c0_42 = arith.constant 0 : index
    %44 = vector.load %arg2[%c7, %c0_41, %c0_42] : memref<9x16x8xbf16, #tpu.memory_space<vmem>>, vector<1x16x8xbf16>
    %45 = vector.shape_cast %44 : vector<1x16x8xbf16> to vector<16x8xbf16>
    %cst_43 = arith.constant dense<0.000000e+00> : vector<16x384xf32>
    %46 = tpu.matmul %45, %43, %cst_43 {dimension_numbers = #tpu.dot_dimension_numbers<[1], [0], [0], [1], [0, 0, 1, 1], [], []>} : vector<16x8xbf16>, vector<8x384xbf16>, vector<16x384xf32> -> vector<16x384xf32>
    %47 = arith.addf %41, %46 : vector<16x384xf32>
    %c0_44 = arith.constant 0 : index
    %c0_45 = arith.constant 0 : index
    %c50 = arith.constant 50 : index
    %48 = vector.load %arg1[%c0_44, %c0_45, %c50] : memref<2x8x456xbf16, #tpu.memory_space<vmem>>, vector<1x8x384xbf16>
    %49 = vector.shape_cast %48 : vector<1x8x384xbf16> to vector<8x384xbf16>
    %c8 = arith.constant 8 : index
    %c0_46 = arith.constant 0 : index
    %c0_47 = arith.constant 0 : index
    %50 = vector.load %arg2[%c8, %c0_46, %c0_47] : memref<9x16x8xbf16, #tpu.memory_space<vmem>>, vector<1x16x8xbf16>
    %51 = vector.shape_cast %50 : vector<1x16x8xbf16> to vector<16x8xbf16>
    %cst_48 = arith.constant dense<0.000000e+00> : vector<16x384xf32>
    %52 = tpu.matmul %51, %49, %cst_48 {dimension_numbers = #tpu.dot_dimension_numbers<[1], [0], [0], [1], [0, 0, 1, 1], [], []>} : vector<16x8xbf16>, vector<8x384xbf16>, vector<16x384xf32> -> vector<16x384xf32>
    %53 = arith.addf %47, %52 : vector<16x384xf32>
    %54 = vector.broadcast %0 : vector<16x1xf32> to vector<16x384xf32>
    %55 = arith.addf %53, %54 : vector<16x384xf32>
    %c0_49 = arith.constant 0 : index
    %c0_50 = arith.constant 0 : index
    %c0_51 = arith.constant 0 : index
    %56 = vector.load %arg4[%c0_49, %c0_50, %c0_51] : memref<2x16x384xf32, #tpu.memory_space<vmem>>, vector<1x16x384xf32>
    %57 = vector.shape_cast %56 : vector<1x16x384xf32> to vector<16x384xf32>
    %58 = vector.shape_cast %55 : vector<16x384xf32> to vector<1x16x384xf32>
    tpu.vector_store %arg4[%c0_49, %c0_50, %c0_51], %58 {strides = array<i32>} : memref<2x16x384xf32, #tpu.memory_space<vmem>>, vector<1x16x384xf32>,
    %c1_52 = arith.constant 1 : index
    %c0_53 = arith.constant 0 : index
    %c0_54 = arith.constant 0 : index
    %59 = vector.load %arg1[%c1_52, %c0_53, %c0_54] : memref<2x8x456xbf16, #tpu.memory_space<vmem>>, vector<1x8x384xbf16>
    %60 = vector.shape_cast %59 : vector<1x8x384xbf16> to vector<8x384xbf16>
    %c0_55 = arith.constant 0 : index
    %c0_56 = arith.constant 0 : index
    %c0_57 = arith.constant 0 : index
    %61 = vector.load %arg2[%c0_55, %c0_56, %c0_57] : memref<9x16x8xbf16, #tpu.memory_space<vmem>>, vector<1x16x8xbf16>
    %62 = vector.shape_cast %61 : vector<1x16x8xbf16> to vector<16x8xbf16>
    %cst_58 = arith.constant dense<0.000000e+00> : vector<16x384xf32>
    %63 = tpu.matmul %62, %60, %cst_58 {dimension_numbers = #tpu.dot_dimension_numbers<[1], [0], [0], [1], [0, 0, 1, 1], [], []>} : vector<16x8xbf16>, vector<8x384xbf16>, vector<16x384xf32> -> vector<16x384xf32>
    %c1_59 = arith.constant 1 : index
    %c0_60 = arith.constant 0 : index
    %c1_61 = arith.constant 1 : index
    %64 = vector.load %arg1[%c1_59, %c0_60, %c1_61] : memref<2x8x456xbf16, #tpu.memory_space<vmem>>, vector<1x8x384xbf16>
    %65 = vector.shape_cast %64 : vector<1x8x384xbf16> to vector<8x384xbf16>
    %c1_62 = arith.constant 1 : index
    %c0_63 = arith.constant 0 : index
    %c0_64 = arith.constant 0 : index
    %66 = vector.load %arg2[%c1_62, %c0_63, %c0_64] : memref<9x16x8xbf16, #tpu.memory_space<vmem>>, vector<1x16x8xbf16>
    %67 = vector.shape_cast %66 : vector<1x16x8xbf16> to vector<16x8xbf16>
    %cst_65 = arith.constant dense<0.000000e+00> : vector<16x384xf32>
    %68 = tpu.matmul %67, %65, %cst_65 {dimension_numbers = #tpu.dot_dimension_numbers<[1], [0], [0], [1], [0, 0, 1, 1], [], []>} : vector<16x8xbf16>, vector<8x384xbf16>, vector<16x384xf32> -> vector<16x384xf32>
    %69 = arith.addf %63, %68 : vector<16x384xf32>
    %c1_66 = arith.constant 1 : index
    %c0_67 = arith.constant 0 : index
    %c2_68 = arith.constant 2 : index
    %70 = vector.load %arg1[%c1_66, %c0_67, %c2_68] : memref<2x8x456xbf16, #tpu.memory_space<vmem>>, vector<1x8x384xbf16>
    %71 = vector.shape_cast %70 : vector<1x8x384xbf16> to vector<8x384xbf16>
    %c2_69 = arith.constant 2 : index
    %c0_70 = arith.constant 0 : index
    %c0_71 = arith.constant 0 : index
    %72 = vector.load %arg2[%c2_69, %c0_70, %c0_71] : memref<9x16x8xbf16, #tpu.memory_space<vmem>>, vector<1x16x8xbf16>
    %73 = vector.shape_cast %72 : vector<1x16x8xbf16> to vector<16x8xbf16>
    %cst_72 = arith.constant dense<0.000000e+00> : vector<16x384xf32>
    %74 = tpu.matmul %73, %71, %cst_72 {dimension_numbers = #tpu.dot_dimension_numbers<[1], [0], [0], [1], [0, 0, 1, 1], [], []>} : vector<16x8xbf16>, vector<8x384xbf16>, vector<16x384xf32> -> vector<16x384xf32>
    %75 = arith.addf %69, %74 : vector<16x384xf32>
    %c1_73 = arith.constant 1 : index
    %c0_74 = arith.constant 0 : index
    %c24_75 = arith.constant 24 : index
    %76 = vector.load %arg1[%c1_73, %c0_74, %c24_75] : memref<2x8x456xbf16, #tpu.memory_space<vmem>>, vector<1x8x384xbf16>
    %77 = vector.shape_cast %76 : vector<1x8x384xbf16> to vector<8x384xbf16>
    %c3_76 = arith.constant 3 : index
    %c0_77 = arith.constant 0 : index
    %c0_78 = arith.constant 0 : index
    %78 = vector.load %arg2[%c3_76, %c0_77, %c0_78] : memref<9x16x8xbf16, #tpu.memory_space<vmem>>, vector<1x16x8xbf16>
    %79 = vector.shape_cast %78 : vector<1x16x8xbf16> to vector<16x8xbf16>
    %cst_79 = arith.constant dense<0.000000e+00> : vector<16x384xf32>
    %80 = tpu.matmul %79, %77, %cst_79 {dimension_numbers = #tpu.dot_dimension_numbers<[1], [0], [0], [1], [0, 0, 1, 1], [], []>} : vector<16x8xbf16>, vector<8x384xbf16>, vector<16x384xf32> -> vector<16x384xf32>
    %81 = arith.addf %75, %80 : vector<16x384xf32>
    %c1_80 = arith.constant 1 : index
    %c0_81 = arith.constant 0 : index
    %c25_82 = arith.constant 25 : index
    %82 = vector.load %arg1[%c1_80, %c0_81, %c25_82] : memref<2x8x456xbf16, #tpu.memory_space<vmem>>, vector<1x8x384xbf16>
    %83 = vector.shape_cast %82 : vector<1x8x384xbf16> to vector<8x384xbf16>
    %c4_83 = arith.constant 4 : index
    %c0_84 = arith.constant 0 : index
    %c0_85 = arith.constant 0 : index
    %84 = vector.load %arg2[%c4_83, %c0_84, %c0_85] : memref<9x16x8xbf16, #tpu.memory_space<vmem>>, vector<1x16x8xbf16>
    %85 = vector.shape_cast %84 : vector<1x16x8xbf16> to vector<16x8xbf16>
    %cst_86 = arith.constant dense<0.000000e+00> : vector<16x384xf32>
    %86 = tpu.matmul %85, %83, %cst_86 {dimension_numbers = #tpu.dot_dimension_numbers<[1], [0], [0], [1], [0, 0, 1, 1], [], []>} : vector<16x8xbf16>, vector<8x384xbf16>, vector<16x384xf32> -> vector<16x384xf32>
    %87 = arith.addf %81, %86 : vector<16x384xf32>
    %c1_87 = arith.constant 1 : index
    %c0_88 = arith.constant 0 : index
    %c26_89 = arith.constant 26 : index
    %88 = vector.load %arg1[%c1_87, %c0_88, %c26_89] : memref<2x8x456xbf16, #tpu.memory_space<vmem>>, vector<1x8x384xbf16>
    %89 = vector.shape_cast %88 : vector<1x8x384xbf16> to vector<8x384xbf16>
    %c5_90 = arith.constant 5 : index
    %c0_91 = arith.constant 0 : index
    %c0_92 = arith.constant 0 : index
    %90 = vector.load %arg2[%c5_90, %c0_91, %c0_92] : memref<9x16x8xbf16, #tpu.memory_space<vmem>>, vector<1x16x8xbf16>
    %91 = vector.shape_cast %90 : vector<1x16x8xbf16> to vector<16x8xbf16>
    %cst_93 = arith.constant dense<0.000000e+00> : vector<16x384xf32>
    %92 = tpu.matmul %91, %89, %cst_93 {dimension_numbers = #tpu.dot_dimension_numbers<[1], [0], [0], [1], [0, 0, 1, 1], [], []>} : vector<16x8xbf16>, vector<8x384xbf16>, vector<16x384xf32> -> vector<16x384xf32>
    %93 = arith.addf %87, %92 : vector<16x384xf32>
    %c1_94 = arith.constant 1 : index
    %c0_95 = arith.constant 0 : index
    %c48_96 = arith.constant 48 : index
    %94 = vector.load %arg1[%c1_94, %c0_95, %c48_96] : memref<2x8x456xbf16, #tpu.memory_space<vmem>>, vector<1x8x384xbf16>
    %95 = vector.shape_cast %94 : vector<1x8x384xbf16> to vector<8x384xbf16>
    %c6_97 = arith.constant 6 : index
    %c0_98 = arith.constant 0 : index
    %c0_99 = arith.constant 0 : index
    %96 = vector.load %arg2[%c6_97, %c0_98, %c0_99] : memref<9x16x8xbf16, #tpu.memory_space<vmem>>, vector<1x16x8xbf16>
    %97 = vector.shape_cast %96 : vector<1x16x8xbf16> to vector<16x8xbf16>
    %cst_100 = arith.constant dense<0.000000e+00> : vector<16x384xf32>
    %98 = tpu.matmul %97, %95, %cst_100 {dimension_numbers = #tpu.dot_dimension_numbers<[1], [0], [0], [1], [0, 0, 1, 1], [], []>} : vector<16x8xbf16>, vector<8x384xbf16>, vector<16x384xf32> -> vector<16x384xf32>
    %99 = arith.addf %93, %98 : vector<16x384xf32>
    %c1_101 = arith.constant 1 : index
    %c0_102 = arith.constant 0 : index
    %c49_103 = arith.constant 49 : index
    %100 = vector.load %arg1[%c1_101, %c0_102, %c49_103] : memref<2x8x456xbf16, #tpu.memory_space<vmem>>, vector<1x8x384xbf16>
    %101 = vector.shape_cast %100 : vector<1x8x384xbf16> to vector<8x384xbf16>
    %c7_104 = arith.constant 7 : index
    %c0_105 = arith.constant 0 : index
    %c0_106 = arith.constant 0 : index
    %102 = vector.load %arg2[%c7_104, %c0_105, %c0_106] : memref<9x16x8xbf16, #tpu.memory_space<vmem>>, vector<1x16x8xbf16>
    %103 = vector.shape_cast %102 : vector<1x16x8xbf16> to vector<16x8xbf16>
    %cst_107 = arith.constant dense<0.000000e+00> : vector<16x384xf32>
    %104 = tpu.matmul %103, %101, %cst_107 {dimension_numbers = #tpu.dot_dimension_numbers<[1], [0], [0], [1], [0, 0, 1, 1], [], []>} : vector<16x8xbf16>, vector<8x384xbf16>, vector<16x384xf32> -> vector<16x384xf32>
    %105 = arith.addf %99, %104 : vector<16x384xf32>
    %c1_108 = arith.constant 1 : index
    %c0_109 = arith.constant 0 : index
    %c50_110 = arith.constant 50 : index
    %106 = vector.load %arg1[%c1_108, %c0_109, %c50_110] : memref<2x8x456xbf16, #tpu.memory_space<vmem>>, vector<1x8x384xbf16>
    %107 = vector.shape_cast %106 : vector<1x8x384xbf16> to vector<8x384xbf16>
    %c8_111 = arith.constant 8 : index
    %c0_112 = arith.constant 0 : index
    %c0_113 = arith.constant 0 : index
    %108 = vector.load %arg2[%c8_111, %c0_112, %c0_113] : memref<9x16x8xbf16, #tpu.memory_space<vmem>>, vector<1x16x8xbf16>
    %109 = vector.shape_cast %108 : vector<1x16x8xbf16> to vector<16x8xbf16>
    %cst_114 = arith.constant dense<0.000000e+00> : vector<16x384xf32>
    %110 = tpu.matmul %109, %107, %cst_114 {dimension_numbers = #tpu.dot_dimension_numbers<[1], [0], [0], [1], [0, 0, 1, 1], [], []>} : vector<16x8xbf16>, vector<8x384xbf16>, vector<16x384xf32> -> vector<16x384xf32>
    %111 = arith.addf %105, %110 : vector<16x384xf32>
    %112 = vector.broadcast %0 : vector<16x1xf32> to vector<16x384xf32>
    %113 = arith.addf %111, %112 : vector<16x384xf32>
    %c1_115 = arith.constant 1 : index
    %c0_116 = arith.constant 0 : index
    %c0_117 = arith.constant 0 : index
    %114 = vector.load %arg4[%c1_115, %c0_116, %c0_117] : memref<2x16x384xf32, #tpu.memory_space<vmem>>, vector<1x16x384xf32>
    %115 = vector.shape_cast %114 : vector<1x16x384xf32> to vector<16x384xf32>
    %116 = vector.shape_cast %113 : vector<16x384xf32> to vector<1x16x384xf32>
    tpu.vector_store %arg4[%c1_115, %c0_116, %c0_117], %116 {strides = array<i32>} : memref<2x16x384xf32, #tpu.memory_space<vmem>>, vector<1x16x384xf32>,
    return
  }
  func.func @transform_0(%arg0: i32) -> (i32, i32, i32) {
    %c0_i32 = arith.constant 0 : i32
    %c0_i32_0 = arith.constant 0 : i32
    %c0_i32_1 = arith.constant 0 : i32
    return %arg0, %c0_i32, %c0_i32_0 : i32, i32, i32
  }
  func.func @transform_1(%arg0: i32) -> (i32, i32, i32) {
    %c0_i32 = arith.constant 0 : i32
    %c0_i32_0 = arith.constant 0 : i32
    %c0_i32_1 = arith.constant 0 : i32
    %c0_i32_2 = arith.constant 0 : i32
    return %c0_i32, %c0_i32_0, %c0_i32_1 : i32, i32, i32
  }
  func.func @transform_2(%arg0: i32) -> (i32, i32) {
    %c0_i32 = arith.constant 0 : i32
    %c0_i32_0 = arith.constant 0 : i32
    %c0_i32_1 = arith.constant 0 : i32
    return %c0_i32, %c0_i32_0 : i32, i32
  }
  func.func @transform_3(%arg0: i32) -> (i32, i32, i32) {
    %c0_i32 = arith.constant 0 : i32
    %c0_i32_0 = arith.constant 0 : i32
    %c0_i32_1 = arith.constant 0 : i32
    return %arg0, %c0_i32, %c0_i32_0 : i32, i32, i32
  }
}

</mosaic_0001>

<llo_original>
// kernel: _upsample_conv_impl.1
$region0: #{_upsample_conv_impl.1}
  #allocation0 [shape = 'u32[]', space=smem, size = 0x4, offset = 0x4, fixed_abs, tag = 'smem constant byte address 0x4 - core index']
  #allocation1 [shape = 'u32[72,128]{1,0:T(1,128)}', space=vmem, size = 0x9000, scoped, tag = 'internal scratch']
  %s0 = inlined_call_operand.vmem [shape: bf16[2,8,456], index: 0, kind: input, shape index: {}]
  %s1 = inlined_call_operand.vmem [shape: bf16[9,16,8], index: 1, kind: input, shape index: {}]
  %s2 = inlined_call_operand.vmem [shape: f32[16,1], index: 2, kind: input, shape index: {}]
  %s3 = inlined_call_operand.vmem [shape: f32[2,16,384], index: 3, kind: output, shape index: {}]
  %s4 = sld [smem:[#allocation0]]
  $region22: #{_upsample_conv_impl.1} parent=0
    _
  %s6 = ssub.s32 1, %s4
  %s7 = scalar_select 0, %s6, %s4
  // Predicated region
  $region2: #{_upsample_conv_impl.1} parent=0 // pred_check
    _
  $region3: #{_upsample_conv_impl.1} parent=0 // pred_check_branch
    %9 = sbr.rel (0) target = $region5
  $region4: #{_upsample_conv_impl.1} parent=0 // pred_region
    _
  $region5: #{_upsample_conv_impl.1} parent=0 // pred_fallthru
    _
  // Predicated region
  $region6: #{_upsample_conv_impl.1} parent=0 // pred_check
    _
  $region7: #{_upsample_conv_impl.1} parent=0 // pred_check_branch
    %11 = sbr.rel (0) target = $region9
  $region8: #{_upsample_conv_impl.1} parent=0 // pred_region
    _
  $region9: #{_upsample_conv_impl.1} parent=0 // pred_fallthru
    _
  // Predicated region
  $region10: #{_upsample_conv_impl.1} parent=0 // pred_check
    _
  $region11: #{_upsample_conv_impl.1} parent=0 // pred_check_branch
    %13 = sbr.rel (0) target = $region13
  $region12: #{_upsample_conv_impl.1} parent=0 // pred_region
    _
  $region13: #{_upsample_conv_impl.1} parent=0 // pred_fallthru
    _
  %v15 = vld [vmem:[%s2] sm:$0xff]
  %v16 = vld [vmem:[%s2 + $0x8] sm:$0xff]
  %v17 = vld [vmem:[%s0] sm:$0xff]
  %v18 = vld [vmem:[%s0 + $0x8] sm:$0xf]
  %v19 = vld [vmem:[%s1] sm:$0xf]
  %v20 = vld [vmem:[%s1 + $0x4] sm:$0xf]
  %v21 = vld [vmem:[%s0 + $0x8] sm:$0xff]
  %s22 = scalar_lea.vmem %s1, 8
  %v23 = vld [vmem:[%s22] sm:$0xf]
  %v24 = vld [vmem:[%s22 + $0x4] sm:$0xf]
  %v27 = vunpack.c.l.b16 %v23
  %v28 = vunpack.c.l.b16 %v24
  %v29 = vpack.c.b16 %v28, %v27
  %v32 = vunpack.c.l.b16 %v17
  %v33 = vunpack.c.h.b16 %v17
  %v34 = vunpack.c.l.b16 %v21
  %v35 = vunpack.c.h.b16 %v21
  %v36 = vpack.c.b16 %v32, %v32
  %v37 = vpack.c.b16 %v33, %v33
  %v38 = vpack.c.b16 %v34, %v34
  %v39 = vpack.c.b16 %v35, %v35
  %40 = vrot.lane.b32.xlu0 %v36, 127
  %v41 = vpop.permute.xlu0 %40
  %42 = vrot.lane.b32.xlu0 %v37, 127
  %v43 = vpop.permute.xlu0 %42
  %44 = vrot.lane.b32.xlu0 %v38, 127
  %v45 = vpop.permute.xlu0 %44
  %46 = vrot.lane.b32.xlu0 %v39, 127
  %v47 = vpop.permute.xlu0 %46
  %vm48 = vcmask 1039360
  %v49 = vsel %vm48, %v41, %v43
  %v50 = vsel %vm48, %v43, %v45
  %v51 = vsel %vm48, %v45, %v47
  %vm52 = vcmask 64512
  %v54 = vsel %vm52, %v29, 0
  %vm56 = vcmask 1043456
  %v58 = vsel %vm56, %v49, 0
  %v61 = vsel %vm56, %v50, 0
  %v64 = vsel %vm56, %v51, 0
  %66 = vmatpush.bf16.msra.mxu0 0
  %67 = vmatpush.bf16.msra.mxu0 0
  %68 = vmatpush.bf16.msra.mxu0 0
  %69 = vmatpush.bf16.msra.mxu0 0
  %70 = vmatpush.bf16.msra.mxu0 0
  %71 = vmatpush.bf16.msra.mxu0 0
  %72 = vmatpush.bf16.msra.mxu0 0
  %73 = vmatpush.bf16.msra.mxu0 %v58
  %74 = vmatmul.bf16.gmra.mxu0 %v54
  %v75 = vpop.f32.mrf.mxu0
  %v76 = vadd.f32 0.0, %v75
  %v77 = vpop.f32.mrf.mxu0
  %v78 = vadd.f32 0.0, %v77
  %79 = vdwg.mxu0
  %80 = vmatpush.bf16.msra.mxu0 0
  %81 = vmatpush.bf16.msra.mxu0 0
  %82 = vmatpush.bf16.msra.mxu0 0
  %83 = vmatpush.bf16.msra.mxu0 0
  %84 = vmatpush.bf16.msra.mxu0 0
  %85 = vmatpush.bf16.msra.mxu0 0
  %86 = vmatpush.bf16.msra.mxu0 0
  %87 = vmatpush.bf16.msra.mxu0 %v61
  %88 = vmatmul.bf16.gmra.mxu0 %v54
  %v89 = vpop.f32.mrf.mxu0
  %v90 = vadd.f32 0.0, %v89
  %v91 = vpop.f32.mrf.mxu0
  %v92 = vadd.f32 0.0, %v91
  %93 = vdwg.mxu0
  %94 = vmatpush.bf16.msra.mxu0 0
  %95 = vmatpush.bf16.msra.mxu0 0
  %96 = vmatpush.bf16.msra.mxu0 0
  %97 = vmatpush.bf16.msra.mxu0 0
  %98 = vmatpush.bf16.msra.mxu0 0
  %99 = vmatpush.bf16.msra.mxu0 0
  %100 = vmatpush.bf16.msra.mxu0 0
  %101 = vmatpush.bf16.msra.mxu0 %v64
  %102 = vmatmul.bf16.gmra.mxu0 %v54
  %v103 = vpop.f32.mrf.mxu0
  %v104 = vadd.f32 0.0, %v103
  %v105 = vpop.f32.mrf.mxu0
  %v106 = vadd.f32 0.0, %v105
  %107 = vdwg.mxu0
  %v110 = vunpack.c.l.b16 %v19
  %v111 = vunpack.c.l.b16 %v20
  %v112 = vpack.c.b16 %v111, %v110
  %v114 = vunpack.c.l.b16 %v18
  %v115 = vpack.c.b16 %v114, %v114
  %v117 = vsel %vm52, %v112, 0
  %v120 = vsel %vm56, %v36, 0
  %v123 = vsel %vm56, %v37, 0
  %v126 = vsel %vm56, %v115, 0
  %128 = vmatpush.bf16.msra.mxu0 0
  %129 = vmatpush.bf16.msra.mxu0 0
  %130 = vmatpush.bf16.msra.mxu0 0
  %131 = vmatpush.bf16.msra.mxu0 0
  %132 = vmatpush.bf16.msra.mxu0 0
  %133 = vmatpush.bf16.msra.mxu0 0
  %134 = vmatpush.bf16.msra.mxu0 0
  %135 = vmatpush.bf16.msra.mxu0 %v120
  %136 = vmatmul.bf16.gmra.mxu0 %v117
  %v137 = vpop.f32.mrf.mxu0
  %v138 = vadd.f32 %v76, %v137
  %v139 = vpop.f32.mrf.mxu0
  %v140 = vadd.f32 %v78, %v139
  %141 = vdwg.mxu0
  %142 = vmatpush.bf16.msra.mxu0 0
  %143 = vmatpush.bf16.msra.mxu0 0
  %144 = vmatpush.bf16.msra.mxu0 0
  %145 = vmatpush.bf16.msra.mxu0 0
  %146 = vmatpush.bf16.msra.mxu0 0
  %147 = vmatpush.bf16.msra.mxu0 0
  %148 = vmatpush.bf16.msra.mxu0 0
  %149 = vmatpush.bf16.msra.mxu0 %v123
  %150 = vmatmul.bf16.gmra.mxu0 %v117
  %v151 = vpop.f32.mrf.mxu0
  %v152 = vadd.f32 %v90, %v151
  %v153 = vpop.f32.mrf.mxu0
  %v154 = vadd.f32 %v92, %v153
  %155 = vdwg.mxu0
  %156 = vmatpush.bf16.msra.mxu0 0
  %157 = vmatpush.bf16.msra.mxu0 0
  %158 = vmatpush.bf16.msra.mxu0 0
  %159 = vmatpush.bf16.msra.mxu0 0
  %160 = vmatpush.bf16.msra.mxu0 0
  %161 = vmatpush.bf16.msra.mxu0 0
  %162 = vmatpush.bf16.msra.mxu0 0
  %163 = vmatpush.bf16.msra.mxu0 %v126
  %164 = vmatmul.bf16.gmra.mxu0 %v117
  %v165 = vpop.f32.mrf.mxu0
  %v166 = vadd.f32 %v104, %v165
  %v167 = vpop.f32.mrf.mxu0
  %v168 = vadd.f32 %v106, %v167
  %169 = vdwg.mxu0
  %s170 = scalar_lea.vmem %s1, 16
  %v171 = vld [vmem:[%s170] sm:$0xf]
  %v172 = vld [vmem:[%s170 + $0x4] sm:$0xf]
  %v175 = vunpack.c.l.b16 %v171
  %v176 = vunpack.c.l.b16 %v172
  %v177 = vpack.c.b16 %v176, %v175
  %178 = vrot.lane.b32.xlu0 %v36, 126
  %v179 = vpop.permute.xlu0 %178
  %180 = vrot.lane.b32.xlu0 %v37, 126
  %v181 = vpop.permute.xlu0 %180
  %182 = vrot.lane.b32.xlu0 %v38, 126
  %v183 = vpop.permute.xlu0 %182
  %184 = vrot.lane.b32.xlu0 %v39, 126
  %v185 = vpop.permute.xlu0 %184
  %vm186 = vcmask 1031168
  %v187 = vsel %vm186, %v179, %v181
  %v188 = vsel %vm186, %v181, %v183
  %v189 = vsel %vm186, %v183, %v185
  %v191 = vsel %vm52, %v177, 0
  %v194 = vsel %vm56, %v187, 0
  %v197 = vsel %vm56, %v188, 0
  %v200 = vsel %vm56, %v189, 0
  %202 = vmatpush.bf16.msra.mxu0 0
  %203 = vmatpush.bf16.msra.mxu0 0
  %204 = vmatpush.bf16.msra.mxu0 0
  %205 = vmatpush.bf16.msra.mxu0 0
  %206 = vmatpush.bf16.msra.mxu0 0
  %207 = vmatpush.bf16.msra.mxu0 0
  %208 = vmatpush.bf16.msra.mxu0 0
  %209 = vmatpush.bf16.msra.mxu0 %v194
  %210 = vmatmul.bf16.gmra.mxu0 %v191
  %v211 = vpop.f32.mrf.mxu0
  %v212 = vadd.f32 0.0, %v211
  %v213 = vpop.f32.mrf.mxu0
  %v214 = vadd.f32 0.0, %v213
  %215 = vdwg.mxu0
  %216 = vmatpush.bf16.msra.mxu0 0
  %217 = vmatpush.bf16.msra.mxu0 0
  %218 = vmatpush.bf16.msra.mxu0 0
  %219 = vmatpush.bf16.msra.mxu0 0
  %220 = vmatpush.bf16.msra.mxu0 0
  %221 = vmatpush.bf16.msra.mxu0 0
  %222 = vmatpush.bf16.msra.mxu0 0
  %223 = vmatpush.bf16.msra.mxu0 %v197
  %224 = vmatmul.bf16.gmra.mxu0 %v191
  %v225 = vpop.f32.mrf.mxu0
  %v226 = vadd.f32 0.0, %v225
  %v227 = vpop.f32.mrf.mxu0
  %v228 = vadd.f32 0.0, %v227
  %229 = vdwg.mxu0
  %230 = vmatpush.bf16.msra.mxu0 0
  %231 = vmatpush.bf16.msra.mxu0 0
  %232 = vmatpush.bf16.msra.mxu0 0
  %233 = vmatpush.bf16.msra.mxu0 0
  %234 = vmatpush.bf16.msra.mxu0 0
  %235 = vmatpush.bf16.msra.mxu0 0
  %236 = vmatpush.bf16.msra.mxu0 0
  %237 = vmatpush.bf16.msra.mxu0 %v200
  %238 = vmatmul.bf16.gmra.mxu0 %v191
  %v239 = vpop.f32.mrf.mxu0
  %v240 = vadd.f32 0.0, %v239
  %v241 = vpop.f32.mrf.mxu0
  %v242 = vadd.f32 0.0, %v241
  %243 = vdwg.mxu0
  %v244 = vadd.f32 %v138, %v212
  %v245 = vadd.f32 %v152, %v226
  %v246 = vadd.f32 %v166, %v240
  %v247 = vadd.f32 %v140, %v214
  %v248 = vadd.f32 %v154, %v228
  %v249 = vadd.f32 %v168, %v242
  %s250 = scalar_lea.vmem %s1, 24
  %v251 = vld [vmem:[%s250] sm:$0xf]
  %v252 = vld [vmem:[%s250 + $0x4] sm:$0xf]
  %v255 = vunpack.c.l.b16 %v251
  %v256 = vunpack.c.l.b16 %v252
  %v257 = vpack.c.b16 %v256, %v255
  %258 = vrot.lane.b32.xlu0 %v36, 104
  %v259 = vpop.permute.xlu0 %258
  %260 = vrot.lane.b32.xlu0 %v37, 104
  %v261 = vpop.permute.xlu0 %260
  %262 = vrot.lane.b32.xlu0 %v38, 104
  %v263 = vpop.permute.xlu0 %262
  %264 = vrot.lane.b32.xlu0 %v39, 104
  %v265 = vpop.permute.xlu0 %264
  %vm266 = vcmask 850944
  %v267 = vsel %vm266, %v259, %v261
  %v268 = vsel %vm266, %v261, %v263
  %v269 = vsel %vm266, %v263, %v265
  %v271 = vsel %vm52, %v257, 0
  %v274 = vsel %vm56, %v267, 0
  %v277 = vsel %vm56, %v268, 0
  %v280 = vsel %vm56, %v269, 0
  %282 = vmatpush.bf16.msra.mxu0 0
  %283 = vmatpush.bf16.msra.mxu0 0
  %284 = vmatpush.bf16.msra.mxu0 0
  %285 = vmatpush.bf16.msra.mxu0 0
  %286 = vmatpush.bf16.msra.mxu0 0
  %287 = vmatpush.bf16.msra.mxu0 0
  %288 = vmatpush.bf16.msra.mxu0 0
  %289 = vmatpush.bf16.msra.mxu0 %v274
  %290 = vmatmul.bf16.gmra.mxu0 %v271
  %v291 = vpop.f32.mrf.mxu0
  %v292 = vadd.f32 0.0, %v291
  %v293 = vpop.f32.mrf.mxu0
  %v294 = vadd.f32 0.0, %v293
  %295 = vdwg.mxu0
  %296 = vmatpush.bf16.msra.mxu0 0
  %297 = vmatpush.bf16.msra.mxu0 0
  %298 = vmatpush.bf16.msra.mxu0 0
  %299 = vmatpush.bf16.msra.mxu0 0
  %300 = vmatpush.bf16.msra.mxu0 0
  %301 = vmatpush.bf16.msra.mxu0 0
  %302 = vmatpush.bf16.msra.mxu0 0
  %303 = vmatpush.bf16.msra.mxu0 %v277
  %304 = vmatmul.bf16.gmra.mxu0 %v271
  %v305 = vpop.f32.mrf.mxu0
  %v306 = vadd.f32 0.0, %v305
  %v307 = vpop.f32.mrf.mxu0
  %v308 = vadd.f32 0.0, %v307
  %309 = vdwg.mxu0
  %310 = vmatpush.bf16.msra.mxu0 0
  %311 = vmatpush.bf16.msra.mxu0 0
  %312 = vmatpush.bf16.msra.mxu0 0
  %313 = vmatpush.bf16.msra.mxu0 0
  %314 = vmatpush.bf16.msra.mxu0 0
  %315 = vmatpush.bf16.msra.mxu0 0
  %316 = vmatpush.bf16.msra.mxu0 0
  %317 = vmatpush.bf16.msra.mxu0 %v280
  %318 = vmatmul.bf16.gmra.mxu0 %v271
  %v319 = vpop.f32.mrf.mxu0
  %v320 = vadd.f32 0.0, %v319
  %v321 = vpop.f32.mrf.mxu0
  %v322 = vadd.f32 0.0, %v321
  %323 = vdwg.mxu0
  %v324 = vadd.f32 %v244, %v292
  %v325 = vadd.f32 %v245, %v306
  %v326 = vadd.f32 %v246, %v320
  %v327 = vadd.f32 %v247, %v294
  %v328 = vadd.f32 %v248, %v308
  %v329 = vadd.f32 %v249, %v322
  %s330 = scalar_lea.vmem %s1, 32
  %v331 = vld [vmem:[%s330] sm:$0xf]
  %v332 = vld [vmem:[%s330 + $0x4] sm:$0xf]
  %v335 = vunpack.c.l.b16 %v331
  %v336 = vunpack.c.l.b16 %v332
  %v337 = vpack.c.b16 %v336, %v335
  %338 = vrot.lane.b32.xlu0 %v36, 103
  %v339 = vpop.permute.xlu0 %338
  %340 = vrot.lane.b32.xlu0 %v37, 103
  %v341 = vpop.permute.xlu0 %340
  %342 = vrot.lane.b32.xlu0 %v38, 103
  %v343 = vpop.permute.xlu0 %342
  %344 = vrot.lane.b32.xlu0 %v39, 103
  %v345 = vpop.permute.xlu0 %344
  %vm346 = vcmask 842752
  %v347 = vsel %vm346, %v339, %v341
  %v348 = vsel %vm346, %v341, %v343
  %v349 = vsel %vm346, %v343, %v345
  %v351 = vsel %vm52, %v337, 0
  %v354 = vsel %vm56, %v347, 0
  %v357 = vsel %vm56, %v348, 0
  %v360 = vsel %vm56, %v349, 0
  %362 = vmatpush.bf16.msra.mxu0 0
  %363 = vmatpush.bf16.msra.mxu0 0
  %364 = vmatpush.bf16.msra.mxu0 0
  %365 = vmatpush.bf16.msra.mxu0 0
  %366 = vmatpush.bf16.msra.mxu0 0
  %367 = vmatpush.bf16.msra.mxu0 0
  %368 = vmatpush.bf16.msra.mxu0 0
  %369 = vmatpush.bf16.msra.mxu0 %v354
  %370 = vmatmul.bf16.gmra.mxu0 %v351
  %v371 = vpop.f32.mrf.mxu0
  %v372 = vadd.f32 0.0, %v371
  %v373 = vpop.f32.mrf.mxu0
  %v374 = vadd.f32 0.0, %v373
  %375 = vdwg.mxu0
  %376 = vmatpush.bf16.msra.mxu0 0
  %377 = vmatpush.bf16.msra.mxu0 0
  %378 = vmatpush.bf16.msra.mxu0 0
  %379 = vmatpush.bf16.msra.mxu0 0
  %380 = vmatpush.bf16.msra.mxu0 0
  %381 = vmatpush.bf16.msra.mxu0 0
  %382 = vmatpush.bf16.msra.mxu0 0
  %383 = vmatpush.bf16.msra.mxu0 %v357
  %384 = vmatmul.bf16.gmra.mxu0 %v351
  %v385 = vpop.f32.mrf.mxu0
  %v386 = vadd.f32 0.0, %v385
  %v387 = vpop.f32.mrf.mxu0
  %v388 = vadd.f32 0.0, %v387
  %389 = vdwg.mxu0
  %390 = vmatpush.bf16.msra.mxu0 0
  %391 = vmatpush.bf16.msra.mxu0 0
  %392 = vmatpush.bf16.msra.mxu0 0
  %393 = vmatpush.bf16.msra.mxu0 0
  %394 = vmatpush.bf16.msra.mxu0 0
  %395 = vmatpush.bf16.msra.mxu0 0
  %396 = vmatpush.bf16.msra.mxu0 0
  %397 = vmatpush.bf16.msra.mxu0 %v360
  %398 = vmatmul.bf16.gmra.mxu0 %v351
  %v399 = vpop.f32.mrf.mxu0
  %v400 = vadd.f32 0.0, %v399
  %v401 = vpop.f32.mrf.mxu0
  %v402 = vadd.f32 0.0, %v401
  %403 = vdwg.mxu0
  %v404 = vadd.f32 %v324, %v372
  %v405 = vadd.f32 %v325, %v386
  %v406 = vadd.f32 %v326, %v400
  %v407 = vadd.f32 %v327, %v374
  %v408 = vadd.f32 %v328, %v388
  %v409 = vadd.f32 %v329, %v402
  %s410 = scalar_lea.vmem %s1, 40
  %v411 = vld [vmem:[%s410] sm:$0xf]
  %v412 = vld [vmem:[%s410 + $0x4] sm:$0xf]
  %v415 = vunpack.c.l.b16 %v411
  %v416 = vunpack.c.l.b16 %v412
  %v417 = vpack.c.b16 %v416, %v415
  %418 = vrot.lane.b32.xlu0 %v36, 102
  %v419 = vpop.permute.xlu0 %418
  %420 = vrot.lane.b32.xlu0 %v37, 102
  %v421 = vpop.permute.xlu0 %420
  %422 = vrot.lane.b32.xlu0 %v38, 102
  %v423 = vpop.permute.xlu0 %422
  %424 = vrot.lane.b32.xlu0 %v39, 102
  %v425 = vpop.permute.xlu0 %424
  %vm426 = vcmask 834560
  %v427 = vsel %vm426, %v419, %v421
  %v428 = vsel %vm426, %v421, %v423
  %v429 = vsel %vm426, %v423, %v425
  %v431 = vsel %vm52, %v417, 0
  %v434 = vsel %vm56, %v427, 0
  %v437 = vsel %vm56, %v428, 0
  %v440 = vsel %vm56, %v429, 0
  %442 = vmatpush.bf16.msra.mxu0 0
  %443 = vmatpush.bf16.msra.mxu0 0
  %444 = vmatpush.bf16.msra.mxu0 0
  %445 = vmatpush.bf16.msra.mxu0 0
  %446 = vmatpush.bf16.msra.mxu0 0
  %447 = vmatpush.bf16.msra.mxu0 0
  %448 = vmatpush.bf16.msra.mxu0 0
  %449 = vmatpush.bf16.msra.mxu0 %v434
  %450 = vmatmul.bf16.gmra.mxu0 %v431
  %v451 = vpop.f32.mrf.mxu0
  %v452 = vadd.f32 0.0, %v451
  %v453 = vpop.f32.mrf.mxu0
  %v454 = vadd.f32 0.0, %v453
  %455 = vdwg.mxu0
  %456 = vmatpush.bf16.msra.mxu0 0
  %457 = vmatpush.bf16.msra.mxu0 0
  %458 = vmatpush.bf16.msra.mxu0 0
  %459 = vmatpush.bf16.msra.mxu0 0
  %460 = vmatpush.bf16.msra.mxu0 0
  %461 = vmatpush.bf16.msra.mxu0 0
  %462 = vmatpush.bf16.msra.mxu0 0
  %463 = vmatpush.bf16.msra.mxu0 %v437
  %464 = vmatmul.bf16.gmra.mxu0 %v431
  %v465 = vpop.f32.mrf.mxu0
  %v466 = vadd.f32 0.0, %v465
  %v467 = vpop.f32.mrf.mxu0
  %v468 = vadd.f32 0.0, %v467
  %469 = vdwg.mxu0
  %470 = vmatpush.bf16.msra.mxu0 0
  %471 = vmatpush.bf16.msra.mxu0 0
  %472 = vmatpush.bf16.msra.mxu0 0
  %473 = vmatpush.bf16.msra.mxu0 0
  %474 = vmatpush.bf16.msra.mxu0 0
  %475 = vmatpush.bf16.msra.mxu0 0
  %476 = vmatpush.bf16.msra.mxu0 0
  %477 = vmatpush.bf16.msra.mxu0 %v440
  %478 = vmatmul.bf16.gmra.mxu0 %v431
  %v479 = vpop.f32.mrf.mxu0
  %v480 = vadd.f32 0.0, %v479
  %v481 = vpop.f32.mrf.mxu0
  %v482 = vadd.f32 0.0, %v481
  %483 = vdwg.mxu0
  %v484 = vadd.f32 %v404, %v452
  %v485 = vadd.f32 %v405, %v466
  %v486 = vadd.f32 %v406, %v480
  %v487 = vadd.f32 %v407, %v454
  %v488 = vadd.f32 %v408, %v468
  %v489 = vadd.f32 %v409, %v482
  %s490 = scalar_lea.vmem %s1, 48
  %v491 = vld [vmem:[%s490] sm:$0xf]
  %v492 = vld [vmem:[%s490 + $0x4] sm:$0xf]
  %v495 = vunpack.c.l.b16 %v491
  %v496 = vunpack.c.l.b16 %v492
  %v497 = vpack.c.b16 %v496, %v495
  %498 = vrot.lane.b32.xlu0 %v36, 80
  %v499 = vpop.permute.xlu0 %498
  %500 = vrot.lane.b32.xlu0 %v37, 80
  %v501 = vpop.permute.xlu0 %500
  %502 = vrot.lane.b32.xlu0 %v38, 80
  %v503 = vpop.permute.xlu0 %502
  %504 = vrot.lane.b32.xlu0 %v39, 80
  %v505 = vpop.permute.xlu0 %504
  %vm506 = vcmask 654336
  %v507 = vsel %vm506, %v499, %v501
  %v508 = vsel %vm506, %v501, %v503
  %v509 = vsel %vm506, %v503, %v505
  %v511 = vsel %vm52, %v497, 0
  %v514 = vsel %vm56, %v507, 0
  %v517 = vsel %vm56, %v508, 0
  %v520 = vsel %vm56, %v509, 0
  %522 = vmatpush.bf16.msra.mxu0 0
  %523 = vmatpush.bf16.msra.mxu0 0
  %524 = vmatpush.bf16.msra.mxu0 0
  %525 = vmatpush.bf16.msra.mxu0 0
  %526 = vmatpush.bf16.msra.mxu0 0
  %527 = vmatpush.bf16.msra.mxu0 0
  %528 = vmatpush.bf16.msra.mxu0 0
  %529 = vmatpush.bf16.msra.mxu0 %v514
  %530 = vmatmul.bf16.gmra.mxu0 %v511
  %v531 = vpop.f32.mrf.mxu0
  %v532 = vadd.f32 0.0, %v531
  %v533 = vpop.f32.mrf.mxu0
  %v534 = vadd.f32 0.0, %v533
  %535 = vdwg.mxu0
  %536 = vmatpush.bf16.msra.mxu0 0
  %537 = vmatpush.bf16.msra.mxu0 0
  %538 = vmatpush.bf16.msra.mxu0 0
  %539 = vmatpush.bf16.msra.mxu0 0
  %540 = vmatpush.bf16.msra.mxu0 0
  %541 = vmatpush.bf16.msra.mxu0 0
  %542 = vmatpush.bf16.msra.mxu0 0
  %543 = vmatpush.bf16.msra.mxu0 %v517
  %544 = vmatmul.bf16.gmra.mxu0 %v511
  %v545 = vpop.f32.mrf.mxu0
  %v546 = vadd.f32 0.0, %v545
  %v547 = vpop.f32.mrf.mxu0
  %v548 = vadd.f32 0.0, %v547
  %549 = vdwg.mxu0
  %550 = vmatpush.bf16.msra.mxu0 0
  %551 = vmatpush.bf16.msra.mxu0 0
  %552 = vmatpush.bf16.msra.mxu0 0
  %553 = vmatpush.bf16.msra.mxu0 0
  %554 = vmatpush.bf16.msra.mxu0 0
  %555 = vmatpush.bf16.msra.mxu0 0
  %556 = vmatpush.bf16.msra.mxu0 0
  %557 = vmatpush.bf16.msra.mxu0 %v520
  %558 = vmatmul.bf16.gmra.mxu0 %v511
  %v559 = vpop.f32.mrf.mxu0
  %v560 = vadd.f32 0.0, %v559
  %v561 = vpop.f32.mrf.mxu0
  %v562 = vadd.f32 0.0, %v561
  %563 = vdwg.mxu0
  %v564 = vadd.f32 %v484, %v532
  %v565 = vadd.f32 %v485, %v546
  %v566 = vadd.f32 %v486, %v560
  %v567 = vadd.f32 %v487, %v534
  %v568 = vadd.f32 %v488, %v548
  %v569 = vadd.f32 %v489, %v562
  %s570 = scalar_lea.vmem %s1, 56
  %v571 = vld [vmem:[%s570] sm:$0xf]
  %v572 = vld [vmem:[%s570 + $0x4] sm:$0xf]
  %v575 = vunpack.c.l.b16 %v571
  %v576 = vunpack.c.l.b16 %v572
  %v577 = vpack.c.b16 %v576, %v575
  %578 = vrot.lane.b32.xlu0 %v36, 79
  %v579 = vpop.permute.xlu0 %578
  %580 = vrot.lane.b32.xlu0 %v37, 79
  %v581 = vpop.permute.xlu0 %580
  %582 = vrot.lane.b32.xlu0 %v38, 79
  %v583 = vpop.permute.xlu0 %582
  %584 = vrot.lane.b32.xlu0 %v39, 79
  %v585 = vpop.permute.xlu0 %584
  %vm586 = vcmask 646144
  %v587 = vsel %vm586, %v579, %v581
  %v588 = vsel %vm586, %v581, %v583
  %v589 = vsel %vm586, %v583, %v585
  %v591 = vsel %vm52, %v577, 0
  %v594 = vsel %vm56, %v587, 0
  %v597 = vsel %vm56, %v588, 0
  %v600 = vsel %vm56, %v589, 0
  %602 = vmatpush.bf16.msra.mxu0 0
  %603 = vmatpush.bf16.msra.mxu0 0
  %604 = vmatpush.bf16.msra.mxu0 0
  %605 = vmatpush.bf16.msra.mxu0 0
  %606 = vmatpush.bf16.msra.mxu0 0
  %607 = vmatpush.bf16.msra.mxu0 0
  %608 = vmatpush.bf16.msra.mxu0 0
  %609 = vmatpush.bf16.msra.mxu0 %v594
  %610 = vmatmul.bf16.gmra.mxu0 %v591
  %v611 = vpop.f32.mrf.mxu0
  %v612 = vadd.f32 0.0, %v611
  %v613 = vpop.f32.mrf.mxu0
  %v614 = vadd.f32 0.0, %v613
  %615 = vdwg.mxu0
  %616 = vmatpush.bf16.msra.mxu0 0
  %617 = vmatpush.bf16.msra.mxu0 0
  %618 = vmatpush.bf16.msra.mxu0 0
  %619 = vmatpush.bf16.msra.mxu0 0
  %620 = vmatpush.bf16.msra.mxu0 0
  %621 = vmatpush.bf16.msra.mxu0 0
  %622 = vmatpush.bf16.msra.mxu0 0
  %623 = vmatpush.bf16.msra.mxu0 %v597
  %624 = vmatmul.bf16.gmra.mxu0 %v591
  %v625 = vpop.f32.mrf.mxu0
  %v626 = vadd.f32 0.0, %v625
  %v627 = vpop.f32.mrf.mxu0
  %v628 = vadd.f32 0.0, %v627
  %629 = vdwg.mxu0
  %630 = vmatpush.bf16.msra.mxu0 0
  %631 = vmatpush.bf16.msra.mxu0 0
  %632 = vmatpush.bf16.msra.mxu0 0
  %633 = vmatpush.bf16.msra.mxu0 0
  %634 = vmatpush.bf16.msra.mxu0 0
  %635 = vmatpush.bf16.msra.mxu0 0
  %636 = vmatpush.bf16.msra.mxu0 0
  %637 = vmatpush.bf16.msra.mxu0 %v600
  %638 = vmatmul.bf16.gmra.mxu0 %v591
  %v639 = vpop.f32.mrf.mxu0
  %v640 = vadd.f32 0.0, %v639
  %v641 = vpop.f32.mrf.mxu0
  %v642 = vadd.f32 0.0, %v641
  %643 = vdwg.mxu0
  %v644 = vadd.f32 %v564, %v612
  %v645 = vadd.f32 %v565, %v626
  %v646 = vadd.f32 %v566, %v640
  %v647 = vadd.f32 %v567, %v614
  %v648 = vadd.f32 %v568, %v628
  %v649 = vadd.f32 %v569, %v642
  %s650 = scalar_lea.vmem %s1, 64
  %v651 = vld [vmem:[%s650] sm:$0xf]
  %v652 = vld [vmem:[%s650 + $0x4] sm:$0xf]
  %v655 = vunpack.c.l.b16 %v651
  %v656 = vunpack.c.l.b16 %v652
  %v657 = vpack.c.b16 %v656, %v655
  %658 = vrot.lane.b32.xlu0 %v36, 78
  %v659 = vpop.permute.xlu0 %658
  %660 = vrot.lane.b32.xlu0 %v37, 78
  %v661 = vpop.permute.xlu0 %660
  %662 = vrot.lane.b32.xlu0 %v38, 78
  %v663 = vpop.permute.xlu0 %662
  %664 = vrot.lane.b32.xlu0 %v39, 78
  %v665 = vpop.permute.xlu0 %664
  %vm666 = vcmask 637952
  %v667 = vsel %vm666, %v659, %v661
  %v668 = vsel %vm666, %v661, %v663
  %v669 = vsel %vm666, %v663, %v665
  %v671 = vsel %vm52, %v657, 0
  %v674 = vsel %vm56, %v667, 0
  %v677 = vsel %vm56, %v668, 0
  %v680 = vsel %vm56, %v669, 0
  %682 = vmatpush.bf16.msra.mxu0 0
  %683 = vmatpush.bf16.msra.mxu0 0
  %684 = vmatpush.bf16.msra.mxu0 0
  %685 = vmatpush.bf16.msra.mxu0 0
  %686 = vmatpush.bf16.msra.mxu0 0
  %687 = vmatpush.bf16.msra.mxu0 0
  %688 = vmatpush.bf16.msra.mxu0 0
  %689 = vmatpush.bf16.msra.mxu0 %v674
  %690 = vmatmul.bf16.gmra.mxu0 %v671
  %v691 = vpop.f32.mrf.mxu0
  %v692 = vadd.f32 0.0, %v691
  %v693 = vpop.f32.mrf.mxu0
  %v694 = vadd.f32 0.0, %v693
  %695 = vdwg.mxu0
  %696 = vmatpush.bf16.msra.mxu0 0
  %697 = vmatpush.bf16.msra.mxu0 0
  %698 = vmatpush.bf16.msra.mxu0 0
  %699 = vmatpush.bf16.msra.mxu0 0
  %700 = vmatpush.bf16.msra.mxu0 0
  %701 = vmatpush.bf16.msra.mxu0 0
  %702 = vmatpush.bf16.msra.mxu0 0
  %703 = vmatpush.bf16.msra.mxu0 %v677
  %704 = vmatmul.bf16.gmra.mxu0 %v671
  %v705 = vpop.f32.mrf.mxu0
  %v706 = vadd.f32 0.0, %v705
  %v707 = vpop.f32.mrf.mxu0
  %v708 = vadd.f32 0.0, %v707
  %709 = vdwg.mxu0
  %710 = vmatpush.bf16.msra.mxu0 0
  %711 = vmatpush.bf16.msra.mxu0 0
  %712 = vmatpush.bf16.msra.mxu0 0
  %713 = vmatpush.bf16.msra.mxu0 0
  %714 = vmatpush.bf16.msra.mxu0 0
  %715 = vmatpush.bf16.msra.mxu0 0
  %716 = vmatpush.bf16.msra.mxu0 0
  %717 = vmatpush.bf16.msra.mxu0 %v680
  %718 = vmatmul.bf16.gmra.mxu0 %v671
  %v719 = vpop.f32.mrf.mxu0
  %v720 = vadd.f32 0.0, %v719
  %v721 = vpop.f32.mrf.mxu0
  %v722 = vadd.f32 0.0, %v721
  %723 = vdwg.mxu0
  %v724 = vadd.f32 %v644, %v692
  %v725 = vadd.f32 %v645, %v706
  %v726 = vadd.f32 %v646, %v720
  %v727 = vadd.f32 %v647, %v694
  %v728 = vadd.f32 %v648, %v708
  %v729 = vadd.f32 %v649, %v722
  %731 = vset.pattern.permute.xlu0 0
  %732 = vperm.xlu0 %731, %v15
  %v733 = vpop.permute.xlu0 %732
  %736 = vset.pattern.permute.xlu0 0
  %737 = vperm.xlu0 %736, %v16
  %v738 = vpop.permute.xlu0 %737
  %v740 = vadd.f32 %v724, %v733
  %v741 = vadd.f32 %v725, %v733
  %v742 = vadd.f32 %v726, %v733
  %v743 = vadd.f32 %v727, %v738
  %v744 = vadd.f32 %v728, %v738
  %v745 = vadd.f32 %v729, %v738
  %746 = vst [vmem:[%s3] sm:$0xff] %v740
  %747 = vst [vmem:[%s3 + $0x8] sm:$0xff] %v741
  %748 = vst [vmem:[%s3 + $0x10] sm:$0xff] %v742
  %749 = vst [vmem:[%s3 + $0x18] sm:$0xff] %v743
  %750 = vst [vmem:[%s3 + $0x20] sm:$0xff] %v744
  %751 = vst [vmem:[%s3 + $0x28] sm:$0xff] %v745
  %s752 = scalar_lea.vmem %s0, 16
  %v753 = vld [vmem:[%s752] sm:$0xff]
  %v754 = vld [vmem:[%s752 + $0x8] sm:$0xf]
  %v755 = vld [vmem:[%s1] sm:$0xf]
  %v756 = vld [vmem:[%s1 + $0x4] sm:$0xf]
  %v757 = vld [vmem:[%s752 + $0x8] sm:$0xff]
  %v758 = vld [vmem:[%s22] sm:$0xf]
  %v759 = vld [vmem:[%s22 + $0x4] sm:$0xf]
  %v762 = vunpack.c.l.b16 %v758
  %v763 = vunpack.c.l.b16 %v759
  %v764 = vpack.c.b16 %v763, %v762
  %v767 = vunpack.c.l.b16 %v753
  %v768 = vunpack.c.h.b16 %v753
  %v769 = vunpack.c.l.b16 %v757
  %v770 = vunpack.c.h.b16 %v757
  %v771 = vpack.c.b16 %v767, %v767
  %v772 = vpack.c.b16 %v768, %v768
  %v773 = vpack.c.b16 %v769, %v769
  %v774 = vpack.c.b16 %v770, %v770
  %775 = vrot.lane.b32.xlu0 %v771, 127
  %v776 = vpop.permute.xlu0 %775
  %777 = vrot.lane.b32.xlu0 %v772, 127
  %v778 = vpop.permute.xlu0 %777
  %779 = vrot.lane.b32.xlu0 %v773, 127
  %v780 = vpop.permute.xlu0 %779
  %781 = vrot.lane.b32.xlu0 %v774, 127
  %v782 = vpop.permute.xlu0 %781
  %v783 = vsel %vm48, %v776, %v778
  %v784 = vsel %vm48, %v778, %v780
  %v785 = vsel %vm48, %v780, %v782
  %v787 = vsel %vm52, %v764, 0
  %v790 = vsel %vm56, %v783, 0
  %v793 = vsel %vm56, %v784, 0
  %v796 = vsel %vm56, %v785, 0
  %798 = vmatpush.bf16.msra.mxu0 0
  %799 = vmatpush.bf16.msra.mxu0 0
  %800 = vmatpush.bf16.msra.mxu0 0
  %801 = vmatpush.bf16.msra.mxu0 0
  %802 = vmatpush.bf16.msra.mxu0 0
  %803 = vmatpush.bf16.msra.mxu0 0
  %804 = vmatpush.bf16.msra.mxu0 0
  %805 = vmatpush.bf16.msra.mxu0 %v790
  %806 = vmatmul.bf16.gmra.mxu0 %v787
  %v807 = vpop.f32.mrf.mxu0
  %v808 = vadd.f32 0.0, %v807
  %v809 = vpop.f32.mrf.mxu0
  %v810 = vadd.f32 0.0, %v809
  %811 = vdwg.mxu0
  %812 = vmatpush.bf16.msra.mxu0 0
  %813 = vmatpush.bf16.msra.mxu0 0
  %814 = vmatpush.bf16.msra.mxu0 0
  %815 = vmatpush.bf16.msra.mxu0 0
  %816 = vmatpush.bf16.msra.mxu0 0
  %817 = vmatpush.bf16.msra.mxu0 0
  %818 = vmatpush.bf16.msra.mxu0 0
  %819 = vmatpush.bf16.msra.mxu0 %v793
  %820 = vmatmul.bf16.gmra.mxu0 %v787
  %v821 = vpop.f32.mrf.mxu0
  %v822 = vadd.f32 0.0, %v821
  %v823 = vpop.f32.mrf.mxu0
  %v824 = vadd.f32 0.0, %v823
  %825 = vdwg.mxu0
  %826 = vmatpush.bf16.msra.mxu0 0
  %827 = vmatpush.bf16.msra.mxu0 0
  %828 = vmatpush.bf16.msra.mxu0 0
  %829 = vmatpush.bf16.msra.mxu0 0
  %830 = vmatpush.bf16.msra.mxu0 0
  %831 = vmatpush.bf16.msra.mxu0 0
  %832 = vmatpush.bf16.msra.mxu0 0
  %833 = vmatpush.bf16.msra.mxu0 %v796
  %834 = vmatmul.bf16.gmra.mxu0 %v787
  %v835 = vpop.f32.mrf.mxu0
  %v836 = vadd.f32 0.0, %v835
  %v837 = vpop.f32.mrf.mxu0
  %v838 = vadd.f32 0.0, %v837
  %839 = vdwg.mxu0
  %v842 = vunpack.c.l.b16 %v755
  %v843 = vunpack.c.l.b16 %v756
  %v844 = vpack.c.b16 %v843, %v842
  %v846 = vunpack.c.l.b16 %v754
  %v847 = vpack.c.b16 %v846, %v846
  %v849 = vsel %vm52, %v844, 0
  %v852 = vsel %vm56, %v771, 0
  %v855 = vsel %vm56, %v772, 0
  %v858 = vsel %vm56, %v847, 0
  %860 = vmatpush.bf16.msra.mxu0 0
  %861 = vmatpush.bf16.msra.mxu0 0
  %862 = vmatpush.bf16.msra.mxu0 0
  %863 = vmatpush.bf16.msra.mxu0 0
  %864 = vmatpush.bf16.msra.mxu0 0
  %865 = vmatpush.bf16.msra.mxu0 0
  %866 = vmatpush.bf16.msra.mxu0 0
  %867 = vmatpush.bf16.msra.mxu0 %v852
  %868 = vmatmul.bf16.gmra.mxu0 %v849
  %v869 = vpop.f32.mrf.mxu0
  %v870 = vadd.f32 %v808, %v869
  %v871 = vpop.f32.mrf.mxu0
  %v872 = vadd.f32 %v810, %v871
  %873 = vdwg.mxu0
  %874 = vmatpush.bf16.msra.mxu0 0
  %875 = vmatpush.bf16.msra.mxu0 0
  %876 = vmatpush.bf16.msra.mxu0 0
  %877 = vmatpush.bf16.msra.mxu0 0
  %878 = vmatpush.bf16.msra.mxu0 0
  %879 = vmatpush.bf16.msra.mxu0 0
  %880 = vmatpush.bf16.msra.mxu0 0
  %881 = vmatpush.bf16.msra.mxu0 %v855
  %882 = vmatmul.bf16.gmra.mxu0 %v849
  %v883 = vpop.f32.mrf.mxu0
  %v884 = vadd.f32 %v822, %v883
  %v885 = vpop.f32.mrf.mxu0
  %v886 = vadd.f32 %v824, %v885
  %887 = vdwg.mxu0
  %888 = vmatpush.bf16.msra.mxu0 0
  %889 = vmatpush.bf16.msra.mxu0 0
  %890 = vmatpush.bf16.msra.mxu0 0
  %891 = vmatpush.bf16.msra.mxu0 0
  %892 = vmatpush.bf16.msra.mxu0 0
  %893 = vmatpush.bf16.msra.mxu0 0
  %894 = vmatpush.bf16.msra.mxu0 0
  %895 = vmatpush.bf16.msra.mxu0 %v858
  %896 = vmatmul.bf16.gmra.mxu0 %v849
  %v897 = vpop.f32.mrf.mxu0
  %v898 = vadd.f32 %v836, %v897
  %v899 = vpop.f32.mrf.mxu0
  %v900 = vadd.f32 %v838, %v899
  %901 = vdwg.mxu0
  %v902 = vld [vmem:[%s170] sm:$0xf]
  %v903 = vld [vmem:[%s170 + $0x4] sm:$0xf]
  %v906 = vunpack.c.l.b16 %v902
  %v907 = vunpack.c.l.b16 %v903
  %v908 = vpack.c.b16 %v907, %v906
  %909 = vrot.lane.b32.xlu0 %v771, 126
  %v910 = vpop.permute.xlu0 %909
  %911 = vrot.lane.b32.xlu0 %v772, 126
  %v912 = vpop.permute.xlu0 %911
  %913 = vrot.lane.b32.xlu0 %v773, 126
  %v914 = vpop.permute.xlu0 %913
  %915 = vrot.lane.b32.xlu0 %v774, 126
  %v916 = vpop.permute.xlu0 %915
  %v917 = vsel %vm186, %v910, %v912
  %v918 = vsel %vm186, %v912, %v914
  %v919 = vsel %vm186, %v914, %v916
  %v921 = vsel %vm52, %v908, 0
  %v924 = vsel %vm56, %v917, 0
  %v927 = vsel %vm56, %v918, 0
  %v930 = vsel %vm56, %v919, 0
  %932 = vmatpush.bf16.msra.mxu0 0
  %933 = vmatpush.bf16.msra.mxu0 0
  %934 = vmatpush.bf16.msra.mxu0 0
  %935 = vmatpush.bf16.msra.mxu0 0
  %936 = vmatpush.bf16.msra.mxu0 0
  %937 = vmatpush.bf16.msra.mxu0 0
  %938 = vmatpush.bf16.msra.mxu0 0
  %939 = vmatpush.bf16.msra.mxu0 %v924
  %940 = vmatmul.bf16.gmra.mxu0 %v921
  %v941 = vpop.f32.mrf.mxu0
  %v942 = vadd.f32 0.0, %v941
  %v943 = vpop.f32.mrf.mxu0
  %v944 = vadd.f32 0.0, %v943
  %945 = vdwg.mxu0
  %946 = vmatpush.bf16.msra.mxu0 0
  %947 = vmatpush.bf16.msra.mxu0 0
  %948 = vmatpush.bf16.msra.mxu0 0
  %949 = vmatpush.bf16.msra.mxu0 0
  %950 = vmatpush.bf16.msra.mxu0 0
  %951 = vmatpush.bf16.msra.mxu0 0
  %952 = vmatpush.bf16.msra.mxu0 0
  %953 = vmatpush.bf16.msra.mxu0 %v927
  %954 = vmatmul.bf16.gmra.mxu0 %v921
  %v955 = vpop.f32.mrf.mxu0
  %v956 = vadd.f32 0.0, %v955
  %v957 = vpop.f32.mrf.mxu0
  %v958 = vadd.f32 0.0, %v957
  %959 = vdwg.mxu0
  %960 = vmatpush.bf16.msra.mxu0 0
  %961 = vmatpush.bf16.msra.mxu0 0
  %962 = vmatpush.bf16.msra.mxu0 0
  %963 = vmatpush.bf16.msra.mxu0 0
  %964 = vmatpush.bf16.msra.mxu0 0
  %965 = vmatpush.bf16.msra.mxu0 0
  %966 = vmatpush.bf16.msra.mxu0 0
  %967 = vmatpush.bf16.msra.mxu0 %v930
  %968 = vmatmul.bf16.gmra.mxu0 %v921
  %v969 = vpop.f32.mrf.mxu0
  %v970 = vadd.f32 0.0, %v969
  %v971 = vpop.f32.mrf.mxu0
  %v972 = vadd.f32 0.0, %v971
  %973 = vdwg.mxu0
  %v974 = vadd.f32 %v870, %v942
  %v975 = vadd.f32 %v884, %v956
  %v976 = vadd.f32 %v898, %v970
  %v977 = vadd.f32 %v872, %v944
  %v978 = vadd.f32 %v886, %v958
  %v979 = vadd.f32 %v900, %v972
  %v980 = vld [vmem:[%s250] sm:$0xf]
  %v981 = vld [vmem:[%s250 + $0x4] sm:$0xf]
  %v984 = vunpack.c.l.b16 %v980
  %v985 = vunpack.c.l.b16 %v981
  %v986 = vpack.c.b16 %v985, %v984
  %987 = vrot.lane.b32.xlu0 %v771, 104
  %v988 = vpop.permute.xlu0 %987
  %989 = vrot.lane.b32.xlu0 %v772, 104
  %v990 = vpop.permute.xlu0 %989
  %991 = vrot.lane.b32.xlu0 %v773, 104
  %v992 = vpop.permute.xlu0 %991
  %993 = vrot.lane.b32.xlu0 %v774, 104
  %v994 = vpop.permute.xlu0 %993
  %v995 = vsel %vm266, %v988, %v990
  %v996 = vsel %vm266, %v990, %v992
  %v997 = vsel %vm266, %v992, %v994
  %v999 = vsel %vm52, %v986, 0
  %v1002 = vsel %vm56, %v995, 0
  %v1005 = vsel %vm56, %v996, 0
  %v1008 = vsel %vm56, %v997, 0
  %1010 = vmatpush.bf16.msra.mxu0 0
  %1011 = vmatpush.bf16.msra.mxu0 0
  %1012 = vmatpush.bf16.msra.mxu0 0
  %1013 = vmatpush.bf16.msra.mxu0 0
  %1014 = vmatpush.bf16.msra.mxu0 0
  %1015 = vmatpush.bf16.msra.mxu0 0
  %1016 = vmatpush.bf16.msra.mxu0 0
  %1017 = vmatpush.bf16.msra.mxu0 %v1002
  %1018 = vmatmul.bf16.gmra.mxu0 %v999
  %v1019 = vpop.f32.mrf.mxu0
  %v1020 = vadd.f32 0.0, %v1019
  %v1021 = vpop.f32.mrf.mxu0
  %v1022 = vadd.f32 0.0, %v1021
  %1023 = vdwg.mxu0
  %1024 = vmatpush.bf16.msra.mxu0 0
  %1025 = vmatpush.bf16.msra.mxu0 0
  %1026 = vmatpush.bf16.msra.mxu0 0
  %1027 = vmatpush.bf16.msra.mxu0 0
  %1028 = vmatpush.bf16.msra.mxu0 0
  %1029 = vmatpush.bf16.msra.mxu0 0
  %1030 = vmatpush.bf16.msra.mxu0 0
  %1031 = vmatpush.bf16.msra.mxu0 %v1005
  %1032 = vmatmul.bf16.gmra.mxu0 %v999
  %v1033 = vpop.f32.mrf.mxu0
  %v1034 = vadd.f32 0.0, %v1033
  %v1035 = vpop.f32.mrf.mxu0
  %v1036 = vadd.f32 0.0, %v1035
  %1037 = vdwg.mxu0
  %1038 = vmatpush.bf16.msra.mxu0 0
  %1039 = vmatpush.bf16.msra.mxu0 0
  %1040 = vmatpush.bf16.msra.mxu0 0
  %1041 = vmatpush.bf16.msra.mxu0 0
  %1042 = vmatpush.bf16.msra.mxu0 0
  %1043 = vmatpush.bf16.msra.mxu0 0
  %1044 = vmatpush.bf16.msra.mxu0 0
  %1045 = vmatpush.bf16.msra.mxu0 %v1008
  %1046 = vmatmul.bf16.gmra.mxu0 %v999
  %v1047 = vpop.f32.mrf.mxu0
  %v1048 = vadd.f32 0.0, %v1047
  %v1049 = vpop.f32.mrf.mxu0
  %v1050 = vadd.f32 0.0, %v1049
  %1051 = vdwg.mxu0
  %v1052 = vadd.f32 %v974, %v1020
  %v1053 = vadd.f32 %v975, %v1034
  %v1054 = vadd.f32 %v976, %v1048
  %v1055 = vadd.f32 %v977, %v1022
  %v1056 = vadd.f32 %v978, %v1036
  %v1057 = vadd.f32 %v979, %v1050
  %v1058 = vld [vmem:[%s330] sm:$0xf]
  %v1059 = vld [vmem:[%s330 + $0x4] sm:$0xf]
  %v1062 = vunpack.c.l.b16 %v1058
  %v1063 = vunpack.c.l.b16 %v1059
  %v1064 = vpack.c.b16 %v1063, %v1062
  %1065 = vrot.lane.b32.xlu0 %v771, 103
  %v1066 = vpop.permute.xlu0 %1065
  %1067 = vrot.lane.b32.xlu0 %v772, 103
  %v1068 = vpop.permute.xlu0 %1067
  %1069 = vrot.lane.b32.xlu0 %v773, 103
  %v1070 = vpop.permute.xlu0 %1069
  %1071 = vrot.lane.b32.xlu0 %v774, 103
  %v1072 = vpop.permute.xlu0 %1071
  %v1073 = vsel %vm346, %v1066, %v1068
  %v1074 = vsel %vm346, %v1068, %v1070
  %v1075 = vsel %vm346, %v1070, %v1072
  %v1077 = vsel %vm52, %v1064, 0
  %v1080 = vsel %vm56, %v1073, 0
  %v1083 = vsel %vm56, %v1074, 0
  %v1086 = vsel %vm56, %v1075, 0
  %1088 = vmatpush.bf16.msra.mxu0 0
  %1089 = vmatpush.bf16.msra.mxu0 0
  %1090 = vmatpush.bf16.msra.mxu0 0
  %1091 = vmatpush.bf16.msra.mxu0 0
  %1092 = vmatpush.bf16.msra.mxu0 0
  %1093 = vmatpush.bf16.msra.mxu0 0
  %1094 = vmatpush.bf16.msra.mxu0 0
  %1095 = vmatpush.bf16.msra.mxu0 %v1080
  %1096 = vmatmul.bf16.gmra.mxu0 %v1077
  %v1097 = vpop.f32.mrf.mxu0
  %v1098 = vadd.f32 0.0, %v1097
  %v1099 = vpop.f32.mrf.mxu0
  %v1100 = vadd.f32 0.0, %v1099
  %1101 = vdwg.mxu0
  %1102 = vmatpush.bf16.msra.mxu0 0
  %1103 = vmatpush.bf16.msra.mxu0 0
  %1104 = vmatpush.bf16.msra.mxu0 0
  %1105 = vmatpush.bf16.msra.mxu0 0
  %1106 = vmatpush.bf16.msra.mxu0 0
  %1107 = vmatpush.bf16.msra.mxu0 0
  %1108 = vmatpush.bf16.msra.mxu0 0
  %1109 = vmatpush.bf16.msra.mxu0 %v1083
  %1110 = vmatmul.bf16.gmra.mxu0 %v1077
  %v1111 = vpop.f32.mrf.mxu0
  %v1112 = vadd.f32 0.0, %v1111
  %v1113 = vpop.f32.mrf.mxu0
  %v1114 = vadd.f32 0.0, %v1113
  %1115 = vdwg.mxu0
  %1116 = vmatpush.bf16.msra.mxu0 0
  %1117 = vmatpush.bf16.msra.mxu0 0
  %1118 = vmatpush.bf16.msra.mxu0 0
  %1119 = vmatpush.bf16.msra.mxu0 0
  %1120 = vmatpush.bf16.msra.mxu0 0
  %1121 = vmatpush.bf16.msra.mxu0 0
  %1122 = vmatpush.bf16.msra.mxu0 0
  %1123 = vmatpush.bf16.msra.mxu0 %v1086
  %1124 = vmatmul.bf16.gmra.mxu0 %v1077
  %v1125 = vpop.f32.mrf.mxu0
  %v1126 = vadd.f32 0.0, %v1125
  %v1127 = vpop.f32.mrf.mxu0
  %v1128 = vadd.f32 0.0, %v1127
  %1129 = vdwg.mxu0
  %v1130 = vadd.f32 %v1052, %v1098
  %v1131 = vadd.f32 %v1053, %v1112
  %v1132 = vadd.f32 %v1054, %v1126
  %v1133 = vadd.f32 %v1055, %v1100
  %v1134 = vadd.f32 %v1056, %v1114
  %v1135 = vadd.f32 %v1057, %v1128
  %v1136 = vld [vmem:[%s410] sm:$0xf]
  %v1137 = vld [vmem:[%s410 + $0x4] sm:$0xf]
  %v1140 = vunpack.c.l.b16 %v1136
  %v1141 = vunpack.c.l.b16 %v1137
  %v1142 = vpack.c.b16 %v1141, %v1140
  %1143 = vrot.lane.b32.xlu0 %v771, 102
  %v1144 = vpop.permute.xlu0 %1143
  %1145 = vrot.lane.b32.xlu0 %v772, 102
  %v1146 = vpop.permute.xlu0 %1145
  %1147 = vrot.lane.b32.xlu0 %v773, 102
  %v1148 = vpop.permute.xlu0 %1147
  %1149 = vrot.lane.b32.xlu0 %v774, 102
  %v1150 = vpop.permute.xlu0 %1149
  %v1151 = vsel %vm426, %v1144, %v1146
  %v1152 = vsel %vm426, %v1146, %v1148
  %v1153 = vsel %vm426, %v1148, %v1150
  %v1155 = vsel %vm52, %v1142, 0
  %v1158 = vsel %vm56, %v1151, 0
  %v1161 = vsel %vm56, %v1152, 0
  %v1164 = vsel %vm56, %v1153, 0
  %1166 = vmatpush.bf16.msra.mxu0 0
  %1167 = vmatpush.bf16.msra.mxu0 0
  %1168 = vmatpush.bf16.msra.mxu0 0
  %1169 = vmatpush.bf16.msra.mxu0 0
  %1170 = vmatpush.bf16.msra.mxu0 0
  %1171 = vmatpush.bf16.msra.mxu0 0
  %1172 = vmatpush.bf16.msra.mxu0 0
  %1173 = vmatpush.bf16.msra.mxu0 %v1158
  %1174 = vmatmul.bf16.gmra.mxu0 %v1155
  %v1175 = vpop.f32.mrf.mxu0
  %v1176 = vadd.f32 0.0, %v1175
  %v1177 = vpop.f32.mrf.mxu0
  %v1178 = vadd.f32 0.0, %v1177
  %1179 = vdwg.mxu0
  %1180 = vmatpush.bf16.msra.mxu0 0
  %1181 = vmatpush.bf16.msra.mxu0 0
  %1182 = vmatpush.bf16.msra.mxu0 0
  %1183 = vmatpush.bf16.msra.mxu0 0
  %1184 = vmatpush.bf16.msra.mxu0 0
  %1185 = vmatpush.bf16.msra.mxu0 0
  %1186 = vmatpush.bf16.msra.mxu0 0
  %1187 = vmatpush.bf16.msra.mxu0 %v1161
  %1188 = vmatmul.bf16.gmra.mxu0 %v1155
  %v1189 = vpop.f32.mrf.mxu0
  %v1190 = vadd.f32 0.0, %v1189
  %v1191 = vpop.f32.mrf.mxu0
  %v1192 = vadd.f32 0.0, %v1191
  %1193 = vdwg.mxu0
  %1194 = vmatpush.bf16.msra.mxu0 0
  %1195 = vmatpush.bf16.msra.mxu0 0
  %1196 = vmatpush.bf16.msra.mxu0 0
  %1197 = vmatpush.bf16.msra.mxu0 0
  %1198 = vmatpush.bf16.msra.mxu0 0
  %1199 = vmatpush.bf16.msra.mxu0 0
  %1200 = vmatpush.bf16.msra.mxu0 0
  %1201 = vmatpush.bf16.msra.mxu0 %v1164
  %1202 = vmatmul.bf16.gmra.mxu0 %v1155
  %v1203 = vpop.f32.mrf.mxu0
  %v1204 = vadd.f32 0.0, %v1203
  %v1205 = vpop.f32.mrf.mxu0
  %v1206 = vadd.f32 0.0, %v1205
  %1207 = vdwg.mxu0
  %v1208 = vadd.f32 %v1130, %v1176
  %v1209 = vadd.f32 %v1131, %v1190
  %v1210 = vadd.f32 %v1132, %v1204
  %v1211 = vadd.f32 %v1133, %v1178
  %v1212 = vadd.f32 %v1134, %v1192
  %v1213 = vadd.f32 %v1135, %v1206
  %v1214 = vld [vmem:[%s490] sm:$0xf]
  %v1215 = vld [vmem:[%s490 + $0x4] sm:$0xf]
  %v1218 = vunpack.c.l.b16 %v1214
  %v1219 = vunpack.c.l.b16 %v1215
  %v1220 = vpack.c.b16 %v1219, %v1218
  %1221 = vrot.lane.b32.xlu0 %v771, 80
  %v1222 = vpop.permute.xlu0 %1221
  %1223 = vrot.lane.b32.xlu0 %v772, 80
  %v1224 = vpop.permute.xlu0 %1223
  %1225 = vrot.lane.b32.xlu0 %v773, 80
  %v1226 = vpop.permute.xlu0 %1225
  %1227 = vrot.lane.b32.xlu0 %v774, 80
  %v1228 = vpop.permute.xlu0 %1227
  %v1229 = vsel %vm506, %v1222, %v1224
  %v1230 = vsel %vm506, %v1224, %v1226
  %v1231 = vsel %vm506, %v1226, %v1228
  %v1233 = vsel %vm52, %v1220, 0
  %v1236 = vsel %vm56, %v1229, 0
  %v1239 = vsel %vm56, %v1230, 0
  %v1242 = vsel %vm56, %v1231, 0
  %1244 = vmatpush.bf16.msra.mxu0 0
  %1245 = vmatpush.bf16.msra.mxu0 0
  %1246 = vmatpush.bf16.msra.mxu0 0
  %1247 = vmatpush.bf16.msra.mxu0 0
  %1248 = vmatpush.bf16.msra.mxu0 0
  %1249 = vmatpush.bf16.msra.mxu0 0
  %1250 = vmatpush.bf16.msra.mxu0 0
  %1251 = vmatpush.bf16.msra.mxu0 %v1236
  %1252 = vmatmul.bf16.gmra.mxu0 %v1233
  %v1253 = vpop.f32.mrf.mxu0
  %v1254 = vadd.f32 0.0, %v1253
  %v1255 = vpop.f32.mrf.mxu0
  %v1256 = vadd.f32 0.0, %v1255
  %1257 = vdwg.mxu0
  %1258 = vmatpush.bf16.msra.mxu0 0
  %1259 = vmatpush.bf16.msra.mxu0 0
  %1260 = vmatpush.bf16.msra.mxu0 0
  %1261 = vmatpush.bf16.msra.mxu0 0
  %1262 = vmatpush.bf16.msra.mxu0 0
  %1263 = vmatpush.bf16.msra.mxu0 0
  %1264 = vmatpush.bf16.msra.mxu0 0
  %1265 = vmatpush.bf16.msra.mxu0 %v1239
  %1266 = vmatmul.bf16.gmra.mxu0 %v1233
  %v1267 = vpop.f32.mrf.mxu0
  %v1268 = vadd.f32 0.0, %v1267
  %v1269 = vpop.f32.mrf.mxu0
  %v1270 = vadd.f32 0.0, %v1269
  %1271 = vdwg.mxu0
  %1272 = vmatpush.bf16.msra.mxu0 0
  %1273 = vmatpush.bf16.msra.mxu0 0
  %1274 = vmatpush.bf16.msra.mxu0 0
  %1275 = vmatpush.bf16.msra.mxu0 0
  %1276 = vmatpush.bf16.msra.mxu0 0
  %1277 = vmatpush.bf16.msra.mxu0 0
  %1278 = vmatpush.bf16.msra.mxu0 0
  %1279 = vmatpush.bf16.msra.mxu0 %v1242
  %1280 = vmatmul.bf16.gmra.mxu0 %v1233
  %v1281 = vpop.f32.mrf.mxu0
  %v1282 = vadd.f32 0.0, %v1281
  %v1283 = vpop.f32.mrf.mxu0
  %v1284 = vadd.f32 0.0, %v1283
  %1285 = vdwg.mxu0
  %v1286 = vadd.f32 %v1208, %v1254
  %v1287 = vadd.f32 %v1209, %v1268
  %v1288 = vadd.f32 %v1210, %v1282
  %v1289 = vadd.f32 %v1211, %v1256
  %v1290 = vadd.f32 %v1212, %v1270
  %v1291 = vadd.f32 %v1213, %v1284
  %v1292 = vld [vmem:[%s570] sm:$0xf]
  %v1293 = vld [vmem:[%s570 + $0x4] sm:$0xf]
  %v1296 = vunpack.c.l.b16 %v1292
  %v1297 = vunpack.c.l.b16 %v1293
  %v1298 = vpack.c.b16 %v1297, %v1296
  %1299 = vrot.lane.b32.xlu0 %v771, 79
  %v1300 = vpop.permute.xlu0 %1299
  %1301 = vrot.lane.b32.xlu0 %v772, 79
  %v1302 = vpop.permute.xlu0 %1301
  %1303 = vrot.lane.b32.xlu0 %v773, 79
  %v1304 = vpop.permute.xlu0 %1303
  %1305 = vrot.lane.b32.xlu0 %v774, 79
  %v1306 = vpop.permute.xlu0 %1305
  %v1307 = vsel %vm586, %v1300, %v1302
  %v1308 = vsel %vm586, %v1302, %v1304
  %v1309 = vsel %vm586, %v1304, %v1306
  %v1311 = vsel %vm52, %v1298, 0
  %v1314 = vsel %vm56, %v1307, 0
  %v1317 = vsel %vm56, %v1308, 0
  %v1320 = vsel %vm56, %v1309, 0
  %1322 = vmatpush.bf16.msra.mxu0 0
  %1323 = vmatpush.bf16.msra.mxu0 0
  %1324 = vmatpush.bf16.msra.mxu0 0
  %1325 = vmatpush.bf16.msra.mxu0 0
  %1326 = vmatpush.bf16.msra.mxu0 0
  %1327 = vmatpush.bf16.msra.mxu0 0
  %1328 = vmatpush.bf16.msra.mxu0 0
  %1329 = vmatpush.bf16.msra.mxu0 %v1314
  %1330 = vmatmul.bf16.gmra.mxu0 %v1311
  %v1331 = vpop.f32.mrf.mxu0
  %v1332 = vadd.f32 0.0, %v1331
  %v1333 = vpop.f32.mrf.mxu0
  %v1334 = vadd.f32 0.0, %v1333
  %1335 = vdwg.mxu0
  %1336 = vmatpush.bf16.msra.mxu0 0
  %1337 = vmatpush.bf16.msra.mxu0 0
  %1338 = vmatpush.bf16.msra.mxu0 0
  %1339 = vmatpush.bf16.msra.mxu0 0
  %1340 = vmatpush.bf16.msra.mxu0 0
  %1341 = vmatpush.bf16.msra.mxu0 0
  %1342 = vmatpush.bf16.msra.mxu0 0
  %1343 = vmatpush.bf16.msra.mxu0 %v1317
  %1344 = vmatmul.bf16.gmra.mxu0 %v1311
  %v1345 = vpop.f32.mrf.mxu0
  %v1346 = vadd.f32 0.0, %v1345
  %v1347 = vpop.f32.mrf.mxu0
  %v1348 = vadd.f32 0.0, %v1347
  %1349 = vdwg.mxu0
  %1350 = vmatpush.bf16.msra.mxu0 0
  %1351 = vmatpush.bf16.msra.mxu0 0
  %1352 = vmatpush.bf16.msra.mxu0 0
  %1353 = vmatpush.bf16.msra.mxu0 0
  %1354 = vmatpush.bf16.msra.mxu0 0
  %1355 = vmatpush.bf16.msra.mxu0 0
  %1356 = vmatpush.bf16.msra.mxu0 0
  %1357 = vmatpush.bf16.msra.mxu0 %v1320
  %1358 = vmatmul.bf16.gmra.mxu0 %v1311
  %v1359 = vpop.f32.mrf.mxu0
  %v1360 = vadd.f32 0.0, %v1359
  %v1361 = vpop.f32.mrf.mxu0
  %v1362 = vadd.f32 0.0, %v1361
  %1363 = vdwg.mxu0
  %v1364 = vadd.f32 %v1286, %v1332
  %v1365 = vadd.f32 %v1287, %v1346
  %v1366 = vadd.f32 %v1288, %v1360
  %v1367 = vadd.f32 %v1289, %v1334
  %v1368 = vadd.f32 %v1290, %v1348
  %v1369 = vadd.f32 %v1291, %v1362
  %v1370 = vld [vmem:[%s650] sm:$0xf]
  %v1371 = vld [vmem:[%s650 + $0x4] sm:$0xf]
  %v1374 = vunpack.c.l.b16 %v1370
  %v1375 = vunpack.c.l.b16 %v1371
  %v1376 = vpack.c.b16 %v1375, %v1374
  %1377 = vrot.lane.b32.xlu0 %v771, 78
  %v1378 = vpop.permute.xlu0 %1377
  %1379 = vrot.lane.b32.xlu0 %v772, 78
  %v1380 = vpop.permute.xlu0 %1379
  %1381 = vrot.lane.b32.xlu0 %v773, 78
  %v1382 = vpop.permute.xlu0 %1381
  %1383 = vrot.lane.b32.xlu0 %v774, 78
  %v1384 = vpop.permute.xlu0 %1383
  %v1385 = vsel %vm666, %v1378, %v1380
  %v1386 = vsel %vm666, %v1380, %v1382
  %v1387 = vsel %vm666, %v1382, %v1384
  %v1389 = vsel %vm52, %v1376, 0
  %v1392 = vsel %vm56, %v1385, 0
  %v1395 = vsel %vm56, %v1386, 0
  %v1398 = vsel %vm56, %v1387, 0
  %1400 = vmatpush.bf16.msra.mxu0 0
  %1401 = vmatpush.bf16.msra.mxu0 0
  %1402 = vmatpush.bf16.msra.mxu0 0
  %1403 = vmatpush.bf16.msra.mxu0 0
  %1404 = vmatpush.bf16.msra.mxu0 0
  %1405 = vmatpush.bf16.msra.mxu0 0
  %1406 = vmatpush.bf16.msra.mxu0 0
  %1407 = vmatpush.bf16.msra.mxu0 %v1392
  %1408 = vmatmul.bf16.gmra.mxu0 %v1389
  %v1409 = vpop.f32.mrf.mxu0
  %v1410 = vadd.f32 0.0, %v1409
  %v1411 = vpop.f32.mrf.mxu0
  %v1412 = vadd.f32 0.0, %v1411
  %1413 = vdwg.mxu0
  %1414 = vmatpush.bf16.msra.mxu0 0
  %1415 = vmatpush.bf16.msra.mxu0 0
  %1416 = vmatpush.bf16.msra.mxu0 0
  %1417 = vmatpush.bf16.msra.mxu0 0
  %1418 = vmatpush.bf16.msra.mxu0 0
  %1419 = vmatpush.bf16.msra.mxu0 0
  %1420 = vmatpush.bf16.msra.mxu0 0
  %1421 = vmatpush.bf16.msra.mxu0 %v1395
  %1422 = vmatmul.bf16.gmra.mxu0 %v1389
  %v1423 = vpop.f32.mrf.mxu0
  %v1424 = vadd.f32 0.0, %v1423
  %v1425 = vpop.f32.mrf.mxu0
  %v1426 = vadd.f32 0.0, %v1425
  %1427 = vdwg.mxu0
  %1428 = vmatpush.bf16.msra.mxu0 0
  %1429 = vmatpush.bf16.msra.mxu0 0
  %1430 = vmatpush.bf16.msra.mxu0 0
  %1431 = vmatpush.bf16.msra.mxu0 0
  %1432 = vmatpush.bf16.msra.mxu0 0
  %1433 = vmatpush.bf16.msra.mxu0 0
  %1434 = vmatpush.bf16.msra.mxu0 0
  %1435 = vmatpush.bf16.msra.mxu0 %v1398
  %1436 = vmatmul.bf16.gmra.mxu0 %v1389
  %v1437 = vpop.f32.mrf.mxu0
  %v1438 = vadd.f32 0.0, %v1437
  %v1439 = vpop.f32.mrf.mxu0
  %v1440 = vadd.f32 0.0, %v1439
  %1441 = vdwg.mxu0
  %v1442 = vadd.f32 %v1364, %v1410
  %v1443 = vadd.f32 %v1365, %v1424
  %v1444 = vadd.f32 %v1366, %v1438
  %v1445 = vadd.f32 %v1367, %v1412
  %v1446 = vadd.f32 %v1368, %v1426
  %v1447 = vadd.f32 %v1369, %v1440
  %v1448 = vadd.f32 %v1442, %v733
  %v1449 = vadd.f32 %v1443, %v733
  %v1450 = vadd.f32 %v1444, %v733
  %v1451 = vadd.f32 %v1445, %v738
  %v1452 = vadd.f32 %v1446, %v738
  %v1453 = vadd.f32 %v1447, %v738
  %s1454 = scalar_lea.vmem %s3, 48
  %1455 = vst [vmem:[%s1454] sm:$0xff] %v1448
  %1456 = vst [vmem:[%s1454 + $0x8] sm:$0xff] %v1449
  %1457 = vst [vmem:[%s1454 + $0x10] sm:$0xff] %v1450
  %1458 = vst [vmem:[%s1454 + $0x18] sm:$0xff] %v1451
  %1459 = vst [vmem:[%s1454 + $0x20] sm:$0xff] %v1452
  %1460 = vst [vmem:[%s1454 + $0x28] sm:$0xff] %v1453
  // Predicated region
  $region14: #{_upsample_conv_impl.1} parent=0 // pred_check
    _
  $region15: #{_upsample_conv_impl.1} parent=0 // pred_check_branch
    %1462 = sbr.rel (0) target = $region17
  $region16: #{_upsample_conv_impl.1} parent=0 // pred_region
    _
  $region17: #{_upsample_conv_impl.1} parent=0 // pred_fallthru
    _
  // Predicated region
  $region18: #{_upsample_conv_impl.1} parent=0 // pred_check
    _
  $region19: #{_upsample_conv_impl.1} parent=0 // pred_check_branch
    %1464 = sbr.rel (0) target = $region21
  $region20: #{_upsample_conv_impl.1} parent=0 // pred_region
    _
  $region21: #{_upsample_conv_impl.1} parent=0 // pred_fallthru
    _

</llo_original>
